<compile_context>
chip_gen: v5e
topology: v5e:2x2
jax: 0.10.0
libtpu: 0.0.40
codegen_flags: <defaults>
</compile_context>

<pallas_src>
import functools

import jax
import jax.numpy as jnp
from jax import lax
from jax.experimental import pallas as pl
from jax.experimental.pallas import tpu as pltpu


def tcn_block_kernel(x_ref, bias1_ref, w1x_ref, w2_ref, w3_ref, pvec_ref, o_ref,
                     *, dilation, eps, t_real, t_pad, bb):
    """One grid step = `bb` batch elements laid out as a (C, bb*t_pad) slab."""
    C = w1x_ref.shape[0]
    N = x_ref.shape[1]                       # bb * t_pad
    f32 = jnp.float32

    # ---- packed per-channel parameters / PReLU slopes (loaded once per step) ----
    g1w = pvec_ref[:, 0:1]
    g1b = pvec_ref[:, 1:2]
    b2  = pvec_ref[:, 2:3]
    g2w = pvec_ref[:, 3:4]
    g2b = pvec_ref[:, 4:5]
    b3  = pvec_ref[:, 5:6]
    a1  = pvec_ref[0:1, 6:7]                 # PReLU slopes (broadcast scalars)
    a2  = pvec_ref[0:1, 7:8]

    w1x = w1x_ref[...]                       # (C, C)   matmul dtype
    w3 = w3_ref[...]                         # (C, C)
    x = x_ref[...]                           # (C, N)   matmul dtype
    x_f32 = x.astype(f32)

    # ---- hoisted index helpers (built once per grid step, no integer division) ----
    row_b = lax.broadcasted_iota(jnp.int32, (bb, N), 0)
    col_n = lax.broadcasted_iota(jnp.int32, (bb, N), 1)
    local = col_n - row_b * t_pad
    member = (local >= 0) & (local < t_pad)                 # column n belongs to element b
    selT = member.astype(f32)                               # (bb, N) 0/1 selector
    t_loc = jnp.sum(jnp.where(member, local, 0), axis=0, keepdims=True)   # (1, N) time index
    valid = t_loc < t_real                                   # real (unpadded) columns

    inv_n = 1.0 / float(C * t_real)

    def mm(w, a):
        # MXU matmul with f32 accumulation; operands cast to the matmul dtype only here.
        return jnp.dot(w, a.astype(w.dtype), preferred_element_type=f32)

    def fused_gln(h, gw, gb):
        # h: (C, N) f32, already zeroed on padded columns.
        colsum = jnp.sum(h, axis=0, keepdims=True)           # (1, N)
        colsq = jnp.sum(h * h, axis=0, keepdims=True)        # (1, N)
        stats = jnp.concatenate([colsum, colsq], axis=0)     # (2, N)
        # per-element segment sums: (2, N) x (bb, N)^T on the MXU
        seg = lax.dot_general(stats, selT, (((1,), (1,)), ((), ())),
                              preferred_element_type=f32)    # (2, bb)
        m = seg[0:1] * inv_n
        var = jnp.maximum(seg[1:2] * inv_n - m * m, 0.0)     # clamp: avoids cancellation < 0
        istd = lax.rsqrt(var + eps)                          # EUP
        coefs = jnp.concatenate([istd, m * istd], axis=0)    # (2, bb)
        rows = jnp.dot(coefs, selT, preferred_element_type=f32)   # broadcast back -> (2, N)
        return gw * (h * rows[0:1] - rows[1:2]) + gb

    # ---- conv1 (1x1, ref folded into per-element bias) + PReLU + GLN1 ----
    bias1_cols = jnp.dot(bias1_ref[0], selT, preferred_element_type=f32)  # (C, N)
    h = mm(w1x, x) + bias1_cols
    h = jnp.where(h >= 0.0, h, a1 * h)                        # PReLU (f32)
    h = jnp.where(valid, h, 0.0)                              # zero padded columns before stats
    h = fused_gln(h, g1w, g1b)

    # ---- dilated conv2 (k=3, right pad 2*d) + PReLU + GLN2 ----
    h2 = mm(w2_ref[0], h) + b2
    for k in (1, 2):                                          # two extra taps (static)
        s = k * dilation
        tap = pltpu.roll(h, shift=N - s, axis=1)              # left-shift by s (XLU)
        tap = jnp.where(t_loc < (t_real - s), tap, 0.0)       # zero wrapped / padded reads
        h2 = h2 + mm(w2_ref[k], tap)
    h2 = jnp.where(h2 >= 0.0, h2, a2 * h2)
    h2 = jnp.where(valid, h2, 0.0)
    h2 = fused_gln(h2, g2w, g2b)

    # ---- conv3 (1x1) + residual ----
    out = mm(w3, h2) + b3 + x_f32
    o_ref[...] = out.astype(o_ref.dtype)


def _vmem_limit_bytes():
    # Per-chip budget: ~3/4 of physical VMEM (v7x: 48 MiB of 64, v5e/v6e: 96 MiB of 128).
    try:
        cap = int(pltpu.get_tpu_info().vmem_capacity_bytes)
    except Exception:
        cap = 64 * 1024 * 1024        # conservative fallback (v7x-sized)
    return (cap * 3) // 4


def _pick_batch_block(B, C, Tp, in_itemsize, vmem_limit):
    # Rough per-batch-element VMEM footprint: double-buffered in/out blocks + f32 work slabs.
    per_elem = C * Tp * (2 * in_itemsize + 2 * 4 + 10 * 4)
    budget = max(vmem_limit - (4 << 20), per_elem)
    divisors = [d for d in range(1, B + 1) if B % d == 0]
    fit = [d for d in divisors if d * per_elem <= budget] or [1]
    pref = [d for d in fit if B // d >= 2]        # keep >=2 grid steps (v7x has 2 TCs)
    return max(pref) if pref else max(fit)


def tcn_block_pallas(x, ref, params, *, dilation, eps=1e-6, batch_block=None,
                     matmul_dtype=jnp.bfloat16):
    B, C, T = x.shape
    (w1, b1, a1, g1w, g1b, w2, b2, a2, g2w, g2b, w3, b3) = params
    out_dtype = x.dtype

    Tp = ((T + 127) // 128) * 128                 # pad time to a lane-dense multiple of 128
    assert 2 * dilation < Tp, "taps require 2*dilation < padded T"

    vmem_limit = _vmem_limit_bytes()
    if batch_block is None:
        batch_block = _pick_batch_block(B, C, Tp, jnp.dtype(matmul_dtype).itemsize,
                                        vmem_limit)
    Bb = batch_block
    assert B % Bb == 0
    N = Bb * Tp

    # ---- host-side layout & parameter prep (tiny, one-off) ----
    xp = x if Tp == T else jnp.pad(x, ((0, 0), (0, 0), (0, Tp - T)))
    x2 = jnp.transpose(xp, (1, 0, 2)).reshape(C, B * Tp).astype(matmul_dtype)

    w1x = w1[:, :C].astype(matmul_dtype)                       # (C, C)
    w1r = w1[:, C:]                                            # (C, R)  kept f32 for the fold
    bias1 = b1 + jnp.dot(w1r, ref.T)                           # (C, B) ref folded into bias
    bias1 = bias1.reshape(C, B // Bb, Bb).transpose(1, 0, 2)   # (grid, C, Bb)
    w2m = w2.astype(matmul_dtype)                              # (3, C, C)  (tap, out, in)
    w3m = w3.astype(matmul_dtype)                              # (C, C)
    a1c = jnp.broadcast_to(jnp.reshape(a1, (1, 1)), (C, 1)).astype(jnp.float32)
    a2c = jnp.broadcast_to(jnp.reshape(a2, (1, 1)), (C, 1)).astype(jnp.float32)
    pvec = jnp.concatenate([g1w, g1b, b2, g2w, g2b, b3, a1c, a2c], axis=1)   # (C, 8)

    kernel = functools.partial(tcn_block_kernel, dilation=dilation, eps=eps,
                               t_real=T, t_pad=Tp, bb=Bb)

    grid_spec = pltpu.PrefetchScalarGridSpec(
        num_scalar_prefetch=0,
        grid=(B // Bb,),
        in_specs=[
            pl.BlockSpec((C, N), lambda i: (0, i)),            # x, channels-major slab
            pl.BlockSpec((1, C, Bb), lambda i: (i, 0, 0)),     # folded conv1 bias per element
            pl.BlockSpec((C, C), lambda i: (0, 0)),            # w1x
            pl.BlockSpec((3, C, C), lambda i: (0, 0, 0)),      # w2 taps
            pl.BlockSpec((C, C), lambda i: (0, 0)),            # w3
            pl.BlockSpec((C, 8), lambda i: (0, 0)),            # packed per-channel params
        ],
        out_specs=pl.BlockSpec((C, N), lambda i: (0, i)),
    )

    out2 = pl.pallas_call(
        kernel,
        out_shape=jax.ShapeDtypeStruct((C, B * Tp), jnp.float32),
        grid_spec=grid_spec,
        compiler_params=pltpu.CompilerParams(
            dimension_semantics=("parallel",),
            vmem_limit_bytes=vmem_limit),
    )(x2, bias1, w1x, w2m, w3m, pvec)

    out = out2.reshape(C, B, Tp).transpose(1, 0, 2)[:, :, :T]
    return out.astype(out_dtype)


def tcn_block_reference(x, ref, params, *, dilation, eps=1e-6):
    """Pure-JAX reference identical to the PyTorch forward."""
    (w1, b1, a1, g1w, g1b, w2, b2, a2, g2w, g2b, w3, b3) = params
    B, C, T = x.shape
    R = ref.shape[1]
    r = jnp.broadcast_to(ref[:, :, None], (B, R, T))
    cat = jnp.concatenate([x, r], axis=1)
    h = jnp.einsum('oi,bit->bot', w1, cat) + b1.reshape(1, C, 1)
    h = jnp.where(h >= 0, h, a1.reshape(()) * h)
    m = h.mean(axis=(1, 2), keepdims=True)
    s = jnp.sqrt(((h - m) ** 2).mean(axis=(1, 2), keepdims=True) + eps)
    h = g1w.reshape(1, C, 1) * ((h - m) / s) + g1b.reshape(1, C, 1)
    hpad = jnp.pad(h, ((0, 0), (0, 0), (0, 2 * dilation)))
    h2 = jnp.broadcast_to(b2.reshape(1, C, 1), (B, C, T))
    for k in range(3):
        h2 = h2 + jnp.einsum('oi,bit->bot', w2[k],
                             hpad[:, :, k * dilation:k * dilation + T])
    h2 = jnp.where(h2 >= 0, h2, a2.reshape(()) * h2)
    m2 = h2.mean(axis=(1, 2), keepdims=True)
    s2 = jnp.sqrt(((h2 - m2) ** 2).mean(axis=(1, 2), keepdims=True) + eps)
    h2 = g2w.reshape(1, C, 1) * ((h2 - m2) / s2) + g2b.reshape(1, C, 1)
    return jnp.einsum('oi,bit->bot', w3, h2) + b3.reshape(1, C, 1) + x


def _make_params(key, C, R):
    ks = jax.random.split(key, 10)
    w1 = jax.random.normal(ks[0], (C, C + R), jnp.float32) * 0.1
    b1 = jax.random.normal(ks[1], (C, 1), jnp.float32) * 0.01
    a1 = jnp.full((1, 1), 0.25, jnp.float32)
    g1w = jax.random.normal(ks[2], (C, 1), jnp.float32)
    g1b = jnp.zeros((C, 1), jnp.float32)
    w2 = jax.random.normal(ks[3], (3, C, C), jnp.float32) * 0.1   # (tap, out, in)
    b2 = jax.random.normal(ks[4], (C, 1), jnp.float32) * 0.01
    a2 = jnp.full((1, 1), 0.25, jnp.float32)
    g2w = jax.random.normal(ks[5], (C, 1), jnp.float32)
    g2b = jnp.zeros((C, 1), jnp.float32)
    w3 = jax.random.normal(ks[6], (C, C), jnp.float32) * 0.1
    b3 = jax.random.normal(ks[7], (C, 1), jnp.float32) * 0.01
    return (w1, b1, a1, g1w, g1b, w2, b2, a2, g2w, g2b, w3, b3)


if __name__ == "__main__":
    key = jax.random.PRNGKey(0)

    # ---- case 1: aligned T; f32 matmuls (exact check) + bf16 matmuls (production path) ----
    B, C, R, T, dil = 8, 8, 8, 128, 2
    k1, k2, k3 = jax.random.split(key, 3)
    x = jax.random.normal(k1, (B, C, T), jnp.float32)
    ref = jax.random.normal(k2, (B, R), jnp.float32)
    params = _make_params(k3, C, R)
    expected = tcn_block_reference(x, ref, params, dilation=dil)

    out = jax.block_until_ready(
        tcn_block_pallas(x, ref, params, dilation=dil, matmul_dtype=jnp.float32))
    assert out.shape == (B, C, T)
    err = float(jnp.max(jnp.abs(out - expected)))
    assert jnp.allclose(out, expected, atol=1e-3, rtol=1e-3), f"f32 max err {err}"

    out_bf16 = jax.block_until_ready(
        tcn_block_pallas(x, ref, params, dilation=dil, matmul_dtype=jnp.bfloat16))
    assert bool(jnp.all(jnp.isfinite(out_bf16)))
    rel = float(jnp.linalg.norm(out_bf16 - expected) / jnp.linalg.norm(expected))
    assert rel < 3e-2, f"bf16 rel err {rel}"

    # ---- case 2: ragged T (100 -> padded to 128 in the kernel), different C / dilation ----
    B2, C2, R2, T2, dil2 = 4, 16, 8, 100, 3
    k4, k5, k6 = jax.random.split(k3, 3)
    x2 = jax.random.normal(k4, (B2, C2, T2), jnp.float32)
    ref2 = jax.random.normal(k5, (B2, R2), jnp.float32)
    params2 = _make_params(k6, C2, R2)
    out2 = jax.block_until_ready(
        tcn_block_pallas(x2, ref2, params2, dilation=dil2, matmul_dtype=jnp.float32))
    exp2 = tcn_block_reference(x2, ref2, params2, dilation=dil2)
    err2 = float(jnp.max(jnp.abs(out2 - exp2)))
    assert jnp.allclose(out2, exp2, atol=1e-3, rtol=1e-3), f"padded-T max err {err2}"

    print("KERNEL_OK")
</pallas_src>

<mosaic_0001>
module attributes {stable_mosaic.version = 11 : i64} {
  func.func @tcn_block_kernel(%arg0: i32, %arg1: memref<8x512xf32, #tpu.memory_space<vmem>>, %arg2: memref<1x8x4xf32, #tpu.memory_space<vmem>>, %arg3: memref<8x8xf32, #tpu.memory_space<vmem>>, %arg4: memref<3x8x8xf32, #tpu.memory_space<vmem>>, %arg5: memref<8x8xf32, #tpu.memory_space<vmem>>, %arg6: memref<8x8xf32, #tpu.memory_space<vmem>>, %arg7: memref<8x512xf32, #tpu.memory_space<vmem>>) attributes {dimension_semantics = [#tpu.dimension_semantics<parallel>], iteration_bounds = array<i64: 2>, scalar_prefetch = 0 : i64, scratch_operands = 0 : i64, tpu.core_type = #tpu.core_type<tc>, window_params = [{transform_indices = @transform_0, window_bounds = array<i64: 8, 512>}, {transform_indices = @transform_1, window_bounds = array<i64: 1, 8, 4>}, {pipeline_mode = #tpu.pipeline_mode<synchronous>, transform_indices = @transform_2, window_bounds = array<i64: 8, 8>}, {pipeline_mode = #tpu.pipeline_mode<synchronous>, transform_indices = @transform_3, window_bounds = array<i64: 3, 8, 8>}, {pipeline_mode = #tpu.pipeline_mode<synchronous>, transform_indices = @transform_4, window_bounds = array<i64: 8, 8>}, {pipeline_mode = #tpu.pipeline_mode<synchronous>, transform_indices = @transform_5, window_bounds = array<i64: 8, 8>}, {transform_indices = @transform_6, window_bounds = array<i64: 8, 512>}]} {
    %c0 = arith.constant 0 : index
    %c0_0 = arith.constant 0 : index
    %0 = vector.load %arg6[%c0, %c0_0] : memref<8x8xf32, #tpu.memory_space<vmem>>, vector<8x1xf32>
    %c0_1 = arith.constant 0 : index
    %c1 = arith.constant 1 : index
    %1 = vector.load %arg6[%c0_1, %c1] : memref<8x8xf32, #tpu.memory_space<vmem>>, vector<8x1xf32>
    %c0_2 = arith.constant 0 : index
    %c2 = arith.constant 2 : index
    %2 = vector.load %arg6[%c0_2, %c2] : memref<8x8xf32, #tpu.memory_space<vmem>>, vector<8x1xf32>
    %c0_3 = arith.constant 0 : index
    %c3 = arith.constant 3 : index
    %3 = vector.load %arg6[%c0_3, %c3] : memref<8x8xf32, #tpu.memory_space<vmem>>, vector<8x1xf32>
    %c0_4 = arith.constant 0 : index
    %c4 = arith.constant 4 : index
    %4 = vector.load %arg6[%c0_4, %c4] : memref<8x8xf32, #tpu.memory_space<vmem>>, vector<8x1xf32>
    %c0_5 = arith.constant 0 : index
    %c5 = arith.constant 5 : index
    %5 = vector.load %arg6[%c0_5, %c5] : memref<8x8xf32, #tpu.memory_space<vmem>>, vector<8x1xf32>
    %c0_6 = arith.constant 0 : index
    %c6 = arith.constant 6 : index
    %6 = vector.load %arg6[%c0_6, %c6] : memref<8x8xf32, #tpu.memory_space<vmem>>, vector<1x1xf32>
    %c0_7 = arith.constant 0 : index
    %c7 = arith.constant 7 : index
    %7 = vector.load %arg6[%c0_7, %c7] : memref<8x8xf32, #tpu.memory_space<vmem>>, vector<1x1xf32>
    %c0_8 = arith.constant 0 : index
    %c0_9 = arith.constant 0 : index
    %8 = vector.load %arg3[%c0_8, %c0_9] : memref<8x8xf32, #tpu.memory_space<vmem>>, vector<8x8xf32>
    %c0_10 = arith.constant 0 : index
    %c0_11 = arith.constant 0 : index
    %9 = vector.load %arg5[%c0_10, %c0_11] : memref<8x8xf32, #tpu.memory_space<vmem>>, vector<8x8xf32>
    %c0_12 = arith.constant 0 : index
    %c0_13 = arith.constant 0 : index
    %10 = vector.load %arg1[%c0_12, %c0_13] : memref<8x512xf32, #tpu.memory_space<vmem>>, vector<8x512xf32>
    %11 = tpu.iota {dimensions = array<i32: 0>} : vector<4x512xi32>
    %12 = tpu.iota {dimensions = array<i32: 1>} : vector<4x512xi32>
    %c128_i32 = arith.constant 128 : i32
    %13 = vector.broadcast %c128_i32 : i32 to vector<4x512xi32>
    %14 = arith.muli %11, %13 : vector<4x512xi32>
    %15 = arith.subi %12, %14 : vector<4x512xi32>
    %c0_i32 = arith.constant 0 : i32
    %16 = vector.broadcast %c0_i32 : i32 to vector<4x512xi32>
    %17 = arith.cmpi sge, %15, %16 : vector<4x512xi32>
    %c128_i32_14 = arith.constant 128 : i32
    %18 = vector.broadcast %c128_i32_14 : i32 to vector<4x512xi32>
    %19 = arith.cmpi slt, %15, %18 : vector<4x512xi32>
    %20 = arith.andi %17, %19 : vector<4x512xi1>
    %21 = arith.extui %20 : vector<4x512xi1> to vector<4x512xi32>
    %22 = arith.sitofp %21 : vector<4x512xi32> to vector<4x512xf32>
    %c0_i32_15 = arith.constant 0 : i32
    %23 = vector.broadcast %c0_i32_15 : i32 to vector<4x512xi32>
    %24 = arith.select %20, %15, %23 : vector<4x512xi1>, vector<4x512xi32>
    %cst = arith.constant dense<0> : vector<512xi32>
    %25 = vector.multi_reduction <add>, %24, %cst [0] : vector<4x512xi32> to vector<512xi32>
    %26 = vector.shape_cast %25 : vector<512xi32> to vector<1x512xi32>
    %c128_i32_16 = arith.constant 128 : i32
    %27 = vector.broadcast %c128_i32_16 : i32 to vector<1x512xi32>
    %28 = arith.cmpi slt, %26, %27 : vector<1x512xi32>
    %c0_17 = arith.constant 0 : index
    %c0_18 = arith.constant 0 : index
    %c0_19 = arith.constant 0 : index
    %29 = vector.load %arg2[%c0_17, %c0_18, %c0_19] : memref<1x8x4xf32, #tpu.memory_space<vmem>>, vector<1x8x4xf32>
    %30 = vector.shape_cast %29 : vector<1x8x4xf32> to vector<8x4xf32>
    %cst_20 = arith.constant dense<0.000000e+00> : vector<8x512xf32>
    %31 = tpu.matmul %30, %22, %cst_20 {dimension_numbers = #tpu.dot_dimension_numbers<[1], [0], [0], [1], [0, 0, 1, 1], [], []>} : vector<8x4xf32>, vector<4x512xf32>, vector<8x512xf32> -> vector<8x512xf32>
    %cst_21 = arith.constant dense<0.000000e+00> : vector<8x512xf32>
    %32 = tpu.matmul %8, %10, %cst_21 {dimension_numbers = #tpu.dot_dimension_numbers<[1], [0], [0], [1], [0, 0, 1, 1], [], []>} : vector<8x8xf32>, vector<8x512xf32>, vector<8x512xf32> -> vector<8x512xf32>
    %33 = arith.addf %32, %31 : vector<8x512xf32>
    %cst_22 = arith.constant 0.000000e+00 : f32
    %34 = vector.broadcast %cst_22 : f32 to vector<8x512xf32>
    %35 = arith.cmpf oge, %33, %34 : vector<8x512xf32>
    %36 = vector.broadcast %6 : vector<1x1xf32> to vector<8x512xf32>
    %37 = arith.mulf %36, %33 : vector<8x512xf32>
    %38 = arith.select %35, %33, %37 : vector<8x512xi1>, vector<8x512xf32>
    %cst_23 = arith.constant 0.000000e+00 : f32
    %39 = vector.shape_cast %28 : vector<1x512xi1> to vector<1x512xi1>
    %40 = vector.broadcast %39 : vector<1x512xi1> to vector<8x512xi1>
    %41 = vector.broadcast %cst_23 : f32 to vector<8x512xf32>
    %42 = arith.select %40, %38, %41 : vector<8x512xi1>, vector<8x512xf32>
    %cst_24 = arith.constant dense<0.000000e+00> : vector<512xf32>
    %43 = vector.multi_reduction <add>, %42, %cst_24 [0] : vector<8x512xf32> to vector<512xf32>
    %44 = vector.shape_cast %43 : vector<512xf32> to vector<1x512xf32>
    %45 = arith.mulf %42, %42 : vector<8x512xf32>
    %cst_25 = arith.constant dense<0.000000e+00> : vector<512xf32>
    %46 = vector.multi_reduction <add>, %45, %cst_25 [0] : vector<8x512xf32> to vector<512xf32>
    %47 = vector.shape_cast %46 : vector<512xf32> to vector<1x512xf32>
    %48 = tpu.concatenate %44, %47 in 0 : vector<1x512xf32>, vector<1x512xf32> -> vector<2x512xf32>
    %cst_26 = arith.constant dense<0.000000e+00> : vector<2x4xf32>
    %49 = tpu.matmul %48, %22, %cst_26 {dimension_numbers = #tpu.dot_dimension_numbers<[1], [1], [0], [0], [0, 0, 1, 0], [], []>} : vector<2x512xf32>, vector<4x512xf32>, vector<2x4xf32> -> vector<2x4xf32>
    %50 = vector.extract_strided_slice %49 {offsets = [0, 0], sizes = [1, 4], strides = [1, 1]} : vector<2x4xf32> to vector<1x4xf32>
    %cst_27 = arith.constant 9.765625E-4 : f32
    %51 = vector.broadcast %cst_27 : f32 to vector<1x4xf32>
    %52 = arith.mulf %50, %51 : vector<1x4xf32>
    %53 = vector.extract_strided_slice %49 {offsets = [1, 0], sizes = [1, 4], strides = [1, 1]} : vector<2x4xf32> to vector<1x4xf32>
    %cst_28 = arith.constant 9.765625E-4 : f32
    %54 = vector.broadcast %cst_28 : f32 to vector<1x4xf32>
    %55 = arith.mulf %53, %54 : vector<1x4xf32>
    %56 = arith.mulf %52, %52 : vector<1x4xf32>
    %57 = arith.subf %55, %56 : vector<1x4xf32>
    %cst_29 = arith.constant 0.000000e+00 : f32
    %58 = vector.broadcast %cst_29 : f32 to vector<1x4xf32>
    %59 = arith.maximumf %57, %58 : vector<1x4xf32>
    %cst_30 = arith.constant 9.99999997E-7 : f32
    %60 = vector.broadcast %cst_30 : f32 to vector<1x4xf32>
    %61 = arith.addf %59, %60 : vector<1x4xf32>
    %62 = math.rsqrt %61 : vector<1x4xf32>
    %63 = arith.mulf %52, %62 : vector<1x4xf32>
    %64 = tpu.concatenate %62, %63 in 0 : vector<1x4xf32>, vector<1x4xf32> -> vector<2x4xf32>
    %cst_31 = arith.constant dense<0.000000e+00> : vector<2x512xf32>
    %65 = tpu.matmul %64, %22, %cst_31 {dimension_numbers = #tpu.dot_dimension_numbers<[1], [0], [0], [1], [0, 0, 1, 1], [], []>} : vector<2x4xf32>, vector<4x512xf32>, vector<2x512xf32> -> vector<2x512xf32>
    %66 = vector.extract_strided_slice %65 {offsets = [0, 0], sizes = [1, 512], strides = [1, 1]} : vector<2x512xf32> to vector<1x512xf32>
    %67 = vector.broadcast %66 : vector<1x512xf32> to vector<8x512xf32>
    %68 = arith.mulf %42, %67 : vector<8x512xf32>
    %69 = vector.extract_strided_slice %65 {offsets = [1, 0], sizes = [1, 512], strides = [1, 1]} : vector<2x512xf32> to vector<1x512xf32>
    %70 = vector.broadcast %69 : vector<1x512xf32> to vector<8x512xf32>
    %71 = arith.subf %68, %70 : vector<8x512xf32>
    %72 = vector.broadcast %0 : vector<8x1xf32> to vector<8x512xf32>
    %73 = arith.mulf %72, %71 : vector<8x512xf32>
    %74 = vector.broadcast %1 : vector<8x1xf32> to vector<8x512xf32>
    %75 = arith.addf %73, %74 : vector<8x512xf32>
    %c0_32 = arith.constant 0 : index
    %c0_33 = arith.constant 0 : index
    %c0_34 = arith.constant 0 : index
    %76 = vector.load %arg4[%c0_32, %c0_33, %c0_34] : memref<3x8x8xf32, #tpu.memory_space<vmem>>, vector<1x8x8xf32>
    %77 = vector.shape_cast %76 : vector<1x8x8xf32> to vector<8x8xf32>
    %cst_35 = arith.constant dense<0.000000e+00> : vector<8x512xf32>
    %78 = tpu.matmul %77, %75, %cst_35 {dimension_numbers = #tpu.dot_dimension_numbers<[1], [0], [0], [1], [0, 0, 1, 1], [], []>} : vector<8x8xf32>, vector<8x512xf32>, vector<8x512xf32> -> vector<8x512xf32>
    %79 = vector.broadcast %2 : vector<8x1xf32> to vector<8x512xf32>
    %80 = arith.addf %78, %79 : vector<8x512xf32>
    %c510_i32 = arith.constant 510 : i32
    %81 = tpu.dynamic_rotate %75 by %c510_i32 dim 1 : vector<8x512xf32>, i32 -> vector<8x512xf32>
    %c126_i32 = arith.constant 126 : i32
    %82 = vector.broadcast %c126_i32 : i32 to vector<1x512xi32>
    %83 = arith.cmpi slt, %26, %82 : vector<1x512xi32>
    %cst_36 = arith.constant 0.000000e+00 : f32
    %84 = vector.shape_cast %83 : vector<1x512xi1> to vector<1x512xi1>
    %85 = vector.broadcast %84 : vector<1x512xi1> to vector<8x512xi1>
    %86 = vector.broadcast %cst_36 : f32 to vector<8x512xf32>
    %87 = arith.select %85, %81, %86 : vector<8x512xi1>, vector<8x512xf32>
    %c1_37 = arith.constant 1 : index
    %c0_38 = arith.constant 0 : index
    %c0_39 = arith.constant 0 : index
    %88 = vector.load %arg4[%c1_37, %c0_38, %c0_39] : memref<3x8x8xf32, #tpu.memory_space<vmem>>, vector<1x8x8xf32>
    %89 = vector.shape_cast %88 : vector<1x8x8xf32> to vector<8x8xf32>
    %cst_40 = arith.constant dense<0.000000e+00> : vector<8x512xf32>
    %90 = tpu.matmul %89, %87, %cst_40 {dimension_numbers = #tpu.dot_dimension_numbers<[1], [0], [0], [1], [0, 0, 1, 1], [], []>} : vector<8x8xf32>, vector<8x512xf32>, vector<8x512xf32> -> vector<8x512xf32>
    %91 = arith.addf %80, %90 : vector<8x512xf32>
    %c508_i32 = arith.constant 508 : i32
    %92 = tpu.dynamic_rotate %75 by %c508_i32 dim 1 : vector<8x512xf32>, i32 -> vector<8x512xf32>
    %c124_i32 = arith.constant 124 : i32
    %93 = vector.broadcast %c124_i32 : i32 to vector<1x512xi32>
    %94 = arith.cmpi slt, %26, %93 : vector<1x512xi32>
    %cst_41 = arith.constant 0.000000e+00 : f32
    %95 = vector.shape_cast %94 : vector<1x512xi1> to vector<1x512xi1>
    %96 = vector.broadcast %95 : vector<1x512xi1> to vector<8x512xi1>
    %97 = vector.broadcast %cst_41 : f32 to vector<8x512xf32>
    %98 = arith.select %96, %92, %97 : vector<8x512xi1>, vector<8x512xf32>
    %c2_42 = arith.constant 2 : index
    %c0_43 = arith.constant 0 : index
    %c0_44 = arith.constant 0 : index
    %99 = vector.load %arg4[%c2_42, %c0_43, %c0_44] : memref<3x8x8xf32, #tpu.memory_space<vmem>>, vector<1x8x8xf32>
    %100 = vector.shape_cast %99 : vector<1x8x8xf32> to vector<8x8xf32>
    %cst_45 = arith.constant dense<0.000000e+00> : vector<8x512xf32>
    %101 = tpu.matmul %100, %98, %cst_45 {dimension_numbers = #tpu.dot_dimension_numbers<[1], [0], [0], [1], [0, 0, 1, 1], [], []>} : vector<8x8xf32>, vector<8x512xf32>, vector<8x512xf32> -> vector<8x512xf32>
    %102 = arith.addf %91, %101 : vector<8x512xf32>
    %cst_46 = arith.constant 0.000000e+00 : f32
    %103 = vector.broadcast %cst_46 : f32 to vector<8x512xf32>
    %104 = arith.cmpf oge, %102, %103 : vector<8x512xf32>
    %105 = vector.broadcast %7 : vector<1x1xf32> to vector<8x512xf32>
    %106 = arith.mulf %105, %102 : vector<8x512xf32>
    %107 = arith.select %104, %102, %106 : vector<8x512xi1>, vector<8x512xf32>
    %cst_47 = arith.constant 0.000000e+00 : f32
    %108 = vector.shape_cast %28 : vector<1x512xi1> to vector<1x512xi1>
    %109 = vector.broadcast %108 : vector<1x512xi1> to vector<8x512xi1>
    %110 = vector.broadcast %cst_47 : f32 to vector<8x512xf32>
    %111 = arith.select %109, %107, %110 : vector<8x512xi1>, vector<8x512xf32>
    %cst_48 = arith.constant dense<0.000000e+00> : vector<512xf32>
    %112 = vector.multi_reduction <add>, %111, %cst_48 [0] : vector<8x512xf32> to vector<512xf32>
    %113 = vector.shape_cast %112 : vector<512xf32> to vector<1x512xf32>
    %114 = arith.mulf %111, %111 : vector<8x512xf32>
    %cst_49 = arith.constant dense<0.000000e+00> : vector<512xf32>
    %115 = vector.multi_reduction <add>, %114, %cst_49 [0] : vector<8x512xf32> to vector<512xf32>
    %116 = vector.shape_cast %115 : vector<512xf32> to vector<1x512xf32>
    %117 = tpu.concatenate %113, %116 in 0 : vector<1x512xf32>, vector<1x512xf32> -> vector<2x512xf32>
    %cst_50 = arith.constant dense<0.000000e+00> : vector<2x4xf32>
    %118 = tpu.matmul %117, %22, %cst_50 {dimension_numbers = #tpu.dot_dimension_numbers<[1], [1], [0], [0], [0, 0, 1, 0], [], []>} : vector<2x512xf32>, vector<4x512xf32>, vector<2x4xf32> -> vector<2x4xf32>
    %119 = vector.extract_strided_slice %118 {offsets = [0, 0], sizes = [1, 4], strides = [1, 1]} : vector<2x4xf32> to vector<1x4xf32>
    %cst_51 = arith.constant 9.765625E-4 : f32
    %120 = vector.broadcast %cst_51 : f32 to vector<1x4xf32>
    %121 = arith.mulf %119, %120 : vector<1x4xf32>
    %122 = vector.extract_strided_slice %118 {offsets = [1, 0], sizes = [1, 4], strides = [1, 1]} : vector<2x4xf32> to vector<1x4xf32>
    %cst_52 = arith.constant 9.765625E-4 : f32
    %123 = vector.broadcast %cst_52 : f32 to vector<1x4xf32>
    %124 = arith.mulf %122, %123 : vector<1x4xf32>
    %125 = arith.mulf %121, %121 : vector<1x4xf32>
    %126 = arith.subf %124, %125 : vector<1x4xf32>
    %cst_53 = arith.constant 0.000000e+00 : f32
    %127 = vector.broadcast %cst_53 : f32 to vector<1x4xf32>
    %128 = arith.maximumf %126, %127 : vector<1x4xf32>
    %cst_54 = arith.constant 9.99999997E-7 : f32
    %129 = vector.broadcast %cst_54 : f32 to vector<1x4xf32>
    %130 = arith.addf %128, %129 : vector<1x4xf32>
    %131 = math.rsqrt %130 : vector<1x4xf32>
    %132 = arith.mulf %121, %131 : vector<1x4xf32>
    %133 = tpu.concatenate %131, %132 in 0 : vector<1x4xf32>, vector<1x4xf32> -> vector<2x4xf32>
    %cst_55 = arith.constant dense<0.000000e+00> : vector<2x512xf32>
    %134 = tpu.matmul %133, %22, %cst_55 {dimension_numbers = #tpu.dot_dimension_numbers<[1], [0], [0], [1], [0, 0, 1, 1], [], []>} : vector<2x4xf32>, vector<4x512xf32>, vector<2x512xf32> -> vector<2x512xf32>
    %135 = vector.extract_strided_slice %134 {offsets = [0, 0], sizes = [1, 512], strides = [1, 1]} : vector<2x512xf32> to vector<1x512xf32>
    %136 = vector.broadcast %135 : vector<1x512xf32> to vector<8x512xf32>
    %137 = arith.mulf %111, %136 : vector<8x512xf32>
    %138 = vector.extract_strided_slice %134 {offsets = [1, 0], sizes = [1, 512], strides = [1, 1]} : vector<2x512xf32> to vector<1x512xf32>
    %139 = vector.broadcast %138 : vector<1x512xf32> to vector<8x512xf32>
    %140 = arith.subf %137, %139 : vector<8x512xf32>
    %141 = vector.broadcast %3 : vector<8x1xf32> to vector<8x512xf32>
    %142 = arith.mulf %141, %140 : vector<8x512xf32>
    %143 = vector.broadcast %4 : vector<8x1xf32> to vector<8x512xf32>
    %144 = arith.addf %142, %143 : vector<8x512xf32>
    %cst_56 = arith.constant dense<0.000000e+00> : vector<8x512xf32>
    %145 = tpu.matmul %9, %144, %cst_56 {dimension_numbers = #tpu.dot_dimension_numbers<[1], [0], [0], [1], [0, 0, 1, 1], [], []>} : vector<8x8xf32>, vector<8x512xf32>, vector<8x512xf32> -> vector<8x512xf32>
    %146 = vector.broadcast %5 : vector<8x1xf32> to vector<8x512xf32>
    %147 = arith.addf %145, %146 : vector<8x512xf32>
    %148 = arith.addf %147, %10 : vector<8x512xf32>
    %c0_57 = arith.constant 0 : index
    %c0_58 = arith.constant 0 : index
    %149 = vector.load %arg7[%c0_57, %c0_58] : memref<8x512xf32, #tpu.memory_space<vmem>>, vector<8x512xf32>
    tpu.vector_store %arg7[%c0_57, %c0_58], %148 {strides = array<i32>} : memref<8x512xf32, #tpu.memory_space<vmem>>, vector<8x512xf32>,
    return
  }
  func.func @transform_0(%arg0: i32) -> (i32, i32) {
    %c0_i32 = arith.constant 0 : i32
    %c0_i32_0 = arith.constant 0 : i32
    return %c0_i32, %arg0 : i32, i32
  }
  func.func @transform_1(%arg0: i32) -> (i32, i32, i32) {
    %c0_i32 = arith.constant 0 : i32
    %c0_i32_0 = arith.constant 0 : i32
    %c0_i32_1 = arith.constant 0 : i32
    return %arg0, %c0_i32, %c0_i32_0 : i32, i32, i32
  }
  func.func @transform_2(%arg0: i32) -> (i32, i32) {
    %c0_i32 = arith.constant 0 : i32
    %c0_i32_0 = arith.constant 0 : i32
    %c0_i32_1 = arith.constant 0 : i32
    return %c0_i32, %c0_i32_0 : i32, i32
  }
  func.func @transform_3(%arg0: i32) -> (i32, i32, i32) {
    %c0_i32 = arith.constant 0 : i32
    %c0_i32_0 = arith.constant 0 : i32
    %c0_i32_1 = arith.constant 0 : i32
    %c0_i32_2 = arith.constant 0 : i32
    return %c0_i32, %c0_i32_0, %c0_i32_1 : i32, i32, i32
  }
  func.func @transform_4(%arg0: i32) -> (i32, i32) {
    %c0_i32 = arith.constant 0 : i32
    %c0_i32_0 = arith.constant 0 : i32
    %c0_i32_1 = arith.constant 0 : i32
    return %c0_i32, %c0_i32_0 : i32, i32
  }
  func.func @transform_5(%arg0: i32) -> (i32, i32) {
    %c0_i32 = arith.constant 0 : i32
    %c0_i32_0 = arith.constant 0 : i32
    %c0_i32_1 = arith.constant 0 : i32
    return %c0_i32, %c0_i32_0 : i32, i32
  }
  func.func @transform_6(%arg0: i32) -> (i32, i32) {
    %c0_i32 = arith.constant 0 : i32
    %c0_i32_0 = arith.constant 0 : i32
    return %c0_i32, %arg0 : i32, i32
  }
}

</mosaic_0001>

<llo_original>
// kernel: tpu_custom_call.1
$region0: #{tpu_custom_call.1}
  #allocation0 [shape = 'u32[]', space=smem, size = 0x4, offset = 0x4, fixed_abs, tag = 'smem constant byte address 0x4 - core index']
  #allocation1 [shape = 'u32[72,128]{1,0:T(1,128)}', space=vmem, size = 0x9000, scoped, tag = 'internal scratch']
  %s0 = inlined_call_operand.hbm [shape: f32[8,1024], index: 0, kind: input, shape index: {}]
  %s1 = inlined_call_operand.vmem [shape: f32[2,8,4], index: 1, kind: input, shape index: {}]
  %s2 = inlined_call_operand.hbm [shape: f32[8,8], index: 2, kind: input, shape index: {}]
  %s3 = inlined_call_operand.vmem [shape: f32[3,8,8], index: 3, kind: input, shape index: {}]
  %s4 = inlined_call_operand.hbm [shape: f32[8,8], index: 4, kind: input, shape index: {}]
  %s5 = inlined_call_operand.hbm [shape: f32[8,8], index: 5, kind: input, shape index: {}]
  %s6 = inlined_call_operand.hbm [shape: f32[8,1024], index: 6, kind: output, shape index: {}]
  %s7 = sld [smem:[#allocation0]]
  $region73: #{tpu_custom_call.1} parent=0
    _
  %s9 = ssub.s32 1, %s7
  %s10 = scalar_select 0, %s9, %s7
  $region1: #{tpu_custom_call.1} parent=0
    #allocation2 [shape = 'u8[32768]{0}', space=vmem, size = 0x8000, scoped, tag = 'input window, operand 0']
    #allocation3 [shape = 's32[2]{0}', space=sflag, size = 0x8, scoped, tag = 'scoped memory for tpu_custom_call.1']
    #allocation4 [shape = 's32[2]{0}', space=sflag, size = 0x8, scoped, tag = 'scoped memory for tpu_custom_call.1']
    #allocation5 [shape = 'u8[4096]{0}', space=vmem, size = 0x1000, scoped, tag = 'input window, operand 2, single buffered']
    #allocation6 [shape = 's32[1]{0}', space=sflag, size = 0x4, scoped, tag = 'scoped memory for tpu_custom_call.1']
    #allocation7 [shape = 'u8[4096]{0}', space=vmem, size = 0x1000, scoped, tag = 'input window, operand 4, single buffered']
    #allocation8 [shape = 'u8[4096]{0}', space=vmem, size = 0x1000, scoped, tag = 'input window, operand 5, single buffered']
    #allocation9 [shape = 's32[1]{0}', space=sflag, size = 0x4, scoped, tag = 'scoped memory for tpu_custom_call.1']
    #allocation10 [shape = 'u8[32768]{0}', space=vmem, size = 0x8000, scoped, tag = 'output window, operand 0']
    %11 = vsyncpa [#allocation3], 0
    %s12 = scalar_lea.sflag [#allocation3], 1
    %13 = vsyncpa %s12, 0
    %14 = vsyncpa [#allocation6], 0
    %15 = vsyncpa [#allocation9], 0
    %16 = vsyncpa [#allocation4], 0
    %s17 = scalar_lea.sflag [#allocation4], 1
    %18 = vsyncpa %s17, 0
    loop: start=0, step=1, limit=4
    $region2: #{tpu_custom_call.1} parent=1 // loop_pre_header
      _
    $region3: #{tpu_custom_call.1} parent=1 // loop_header
      %s20 = sphi 0, %s24
      %p21 = scmp.ge.s32.totalorder %s20, 4
      %s30 = sphi 0, %s32
      %s33 = sphi 0, %s30
      %s34 = sphi 0, %s33
      %s50 = sphi 0, %s34
      %s56 = sphi 0, %s58
      %s59 = sphi 0, %s56
      %s60 = sphi 0, %s59
      %s76 = sphi 0, %s60
      %s80 = sphi 0, %s80
      %s82 = sphi 0, %s80
      %s83 = sphi 0, %s82
      %s97 = sphi 0, %s83
      %s101 = sphi 0, %s101
      %s103 = sphi 0, %s101
      %s104 = sphi 0, %s103
      %s118 = sphi 0, %s104
      %s122 = sphi 0, %s122
      %s124 = sphi 0, %s122
      %s125 = sphi 0, %s124
      %s139 = sphi 0, %s125
      %s143 = sphi 0, %s143
      %s145 = sphi 0, %s143
      %s146 = sphi 0, %s145
      %s160 = sphi 0, %s146
      %s166 = sphi 0, %s168
      %s169 = sphi 0, %s166
      %s170 = sphi 0, %s169
      %s186 = sphi 0, %s170
    $region4: #{tpu_custom_call.1} parent=1 // loop_header_branch
      %23 = sbr.rel (%p21) target = $region8
    $region5: #{tpu_custom_call.1} parent=1 // loop_body
      %s25 = ssub.s32 %s20, 1
      %s26 = ssub.s32 %s20, 2
      %s27 = sadd.s32 %s20, 1
      %s28 = ssub.s32 %s20, %s27
      %p29 = scmp.eq.s32.totalorder %s28, 0
      %s31 = sadd.s32 %s30, 1
      %s32 = scalar_select %p29, %s30, %s31
      %p35 = pneg %p29
      %p36 = scmp.eq.s32.totalorder %s20, 1
      %p37 = por %p35, %p36
      %p38 = scmp.ne.s32.totalorder %s30, %s33
      %p39 = scmp.eq.s32.totalorder %s20, 0
      %p40 = por %p38, %p39
      %p41 = scmp.ne.s32.totalorder %s30, %s33
      %p42 = scmp.eq.s32.totalorder %s25, 1
      %p43 = por %p41, %p42
      %p44 = scmp.ne.s32.totalorder %s33, %s34
      %p45 = scmp.eq.s32.totalorder %s25, 0
      %p46 = por %p44, %p45
      %p47 = scmp.ne.s32.totalorder %s33, %s34
      %p48 = scmp.eq.s32.totalorder %s26, 1
      %p49 = por %p47, %p48
      %p51 = scmp.ne.s32.totalorder %s34, %s50
      %p52 = scmp.eq.s32.totalorder %s26, 0
      %p53 = por %p51, %p52
      %s54 = ssub.s32 %s20, %s27
      %p55 = scmp.eq.s32.totalorder %s54, 0
      %s57 = sadd.s32 %s56, 1
      %s58 = scalar_select %p55, %s56, %s57
      %p61 = pneg %p55
      %p62 = scmp.eq.s32.totalorder %s20, 1
      %p63 = por %p61, %p62
      %p64 = scmp.ne.s32.totalorder %s56, %s59
      %p65 = scmp.eq.s32.totalorder %s20, 0
      %p66 = por %p64, %p65
      %p67 = scmp.ne.s32.totalorder %s56, %s59
      %p68 = scmp.eq.s32.totalorder %s25, 1
      %p69 = por %p67, %p68
      %p70 = scmp.ne.s32.totalorder %s59, %s60
      %p71 = scmp.eq.s32.totalorder %s25, 0
      %p72 = por %p70, %p71
      %p73 = scmp.ne.s32.totalorder %s59, %s60
      %p74 = scmp.eq.s32.totalorder %s26, 1
      %p75 = por %p73, %p74
      %p77 = scmp.ne.s32.totalorder %s60, %s76
      %p78 = scmp.eq.s32.totalorder %s26, 0
      %p79 = por %p77, %p78
      %s81 = sadd.s32 %s80, 1
      %p84 = scmp.eq.s32.totalorder %s20, 1
      %p85 = scmp.ne.s32.totalorder %s80, %s82
      %p86 = scmp.eq.s32.totalorder %s20, 0
      %p87 = por %p85, %p86
      %p88 = scmp.ne.s32.totalorder %s80, %s82
      %p89 = scmp.eq.s32.totalorder %s25, 1
      %p90 = por %p88, %p89
      %p91 = scmp.ne.s32.totalorder %s82, %s83
      %p92 = scmp.eq.s32.totalorder %s25, 0
      %p93 = por %p91, %p92
      %p94 = scmp.ne.s32.totalorder %s82, %s83
      %p95 = scmp.eq.s32.totalorder %s26, 1
      %p96 = por %p94, %p95
      %p98 = scmp.ne.s32.totalorder %s83, %s97
      %p99 = scmp.eq.s32.totalorder %s26, 0
      %p100 = por %p98, %p99
      %s102 = sadd.s32 %s101, 1
      %p105 = scmp.eq.s32.totalorder %s20, 1
      %p106 = scmp.ne.s32.totalorder %s101, %s103
      %p107 = scmp.eq.s32.totalorder %s20, 0
      %p108 = por %p106, %p107
      %p109 = scmp.ne.s32.totalorder %s101, %s103
      %p110 = scmp.eq.s32.totalorder %s25, 1
      %p111 = por %p109, %p110
      %p112 = scmp.ne.s32.totalorder %s103, %s104
      %p113 = scmp.eq.s32.totalorder %s25, 0
      %p114 = por %p112, %p113
      %p115 = scmp.ne.s32.totalorder %s103, %s104
      %p116 = scmp.eq.s32.totalorder %s26, 1
      %p117 = por %p115, %p116
      %p119 = scmp.ne.s32.totalorder %s104, %s118
      %p120 = scmp.eq.s32.totalorder %s26, 0
      %p121 = por %p119, %p120
      %s123 = sadd.s32 %s122, 1
      %p126 = scmp.eq.s32.totalorder %s20, 1
      %p127 = scmp.ne.s32.totalorder %s122, %s124
      %p128 = scmp.eq.s32.totalorder %s20, 0
      %p129 = por %p127, %p128
      %p130 = scmp.ne.s32.totalorder %s122, %s124
      %p131 = scmp.eq.s32.totalorder %s25, 1
      %p132 = por %p130, %p131
      %p133 = scmp.ne.s32.totalorder %s124, %s125
      %p134 = scmp.eq.s32.totalorder %s25, 0
      %p135 = por %p133, %p134
      %p136 = scmp.ne.s32.totalorder %s124, %s125
      %p137 = scmp.eq.s32.totalorder %s26, 1
      %p138 = por %p136, %p137
      %p140 = scmp.ne.s32.totalorder %s125, %s139
      %p141 = scmp.eq.s32.totalorder %s26, 0
      %p142 = por %p140, %p141
      %s144 = sadd.s32 %s143, 1
      %p147 = scmp.eq.s32.totalorder %s20, 1
      %p148 = scmp.ne.s32.totalorder %s143, %s145
      %p149 = scmp.eq.s32.totalorder %s20, 0
      %p150 = por %p148, %p149
      %p151 = scmp.ne.s32.totalorder %s143, %s145
      %p152 = scmp.eq.s32.totalorder %s25, 1
      %p153 = por %p151, %p152
      %p154 = scmp.ne.s32.totalorder %s145, %s146
      %p155 = scmp.eq.s32.totalorder %s25, 0
      %p156 = por %p154, %p155
      %p157 = scmp.ne.s32.totalorder %s145, %s146
      %p158 = scmp.eq.s32.totalorder %s26, 1
      %p159 = por %p157, %p158
      %p161 = scmp.ne.s32.totalorder %s146, %s160
      %p162 = scmp.eq.s32.totalorder %s26, 0
      %p163 = por %p161, %p162
      %s164 = ssub.s32 %s20, %s27
      %p165 = scmp.eq.s32.totalorder %s164, 0
      %s167 = sadd.s32 %s166, 1
      %s168 = scalar_select %p165, %s166, %s167
      %p171 = pneg %p165
      %p172 = scmp.eq.s32.totalorder %s20, 1
      %p173 = por %p171, %p172
      %p174 = scmp.ne.s32.totalorder %s166, %s169
      %p175 = scmp.eq.s32.totalorder %s20, 0
      %p176 = por %p174, %p175
      %p177 = scmp.ne.s32.totalorder %s166, %s169
      %p178 = scmp.eq.s32.totalorder %s25, 1
      %p179 = por %p177, %p178
      %p180 = scmp.ne.s32.totalorder %s169, %s170
      %p181 = scmp.eq.s32.totalorder %s25, 0
      %p182 = por %p180, %p181
      %p183 = scmp.ne.s32.totalorder %s169, %s170
      %p184 = scmp.eq.s32.totalorder %s26, 1
      %p185 = por %p183, %p184
      %p187 = scmp.ne.s32.totalorder %s170, %s186
      %p188 = scmp.eq.s32.totalorder %s26, 0
      %p189 = por %p187, %p188
      %p190 = scmp.le.s32.totalorder 1, %s20
      %p191 = scmp.lt.s32.totalorder %s20, 3
      %p192 = pnand %p190, %p191
      %p193 = pneg %p192
      // Predicated region
      $region9: #{tpu_custom_call.1} parent=5 // pred_check
        _
      $region10: #{tpu_custom_call.1} parent=5 // pred_check_branch
        %195 = sbr.rel (%p192) target = $region12
      $region11: #{tpu_custom_call.1} parent=5 // pred_region
        %s196 = ssub.s32 %s20, 1
        // Predicated region
        $region13: #{tpu_custom_call.1} parent=11 // pred_check
          %p197 = pneg %p93
        $region14: #{tpu_custom_call.1} parent=11 // pred_check_branch
          %199 = sbr.rel (%p197) target = $region16
        $region15: #{tpu_custom_call.1} parent=11 // pred_region
          %201 = vsyncadd [#allocation6], 0
          %s203 = sshll.u32 %s2, 4
          %s204 = int_to_ptr.hbm [resolvable:$true] %s203
          %s205 = sshll.u32 [#allocation5], 4
          %s206 = int_to_ptr.vmem [resolvable:$true] %s205
          %208 = dma.hbm_to_vmem [thread:$0]  %s204, 128, %s206, [#allocation6]
        $region16: #{tpu_custom_call.1} parent=11 // pred_fallthru
          _
        // Predicated region
        $region17: #{tpu_custom_call.1} parent=11 // pred_check
          %p209 = pneg %p114
        $region18: #{tpu_custom_call.1} parent=11 // pred_check_branch
          %211 = sbr.rel (%p209) target = $region20
        $region19: #{tpu_custom_call.1} parent=11 // pred_region
          _
        $region20: #{tpu_custom_call.1} parent=11 // pred_fallthru
          _
        // Predicated region
        $region21: #{tpu_custom_call.1} parent=11 // pred_check
          %p212 = pneg %p135
        $region22: #{tpu_custom_call.1} parent=11 // pred_check_branch
          %214 = sbr.rel (%p212) target = $region24
        $region23: #{tpu_custom_call.1} parent=11 // pred_region
          %216 = vsyncadd [#allocation6], 0
          %s218 = sshll.u32 %s4, 4
          %s219 = int_to_ptr.hbm [resolvable:$true] %s218
          %s220 = sshll.u32 [#allocation7], 4
          %s221 = int_to_ptr.vmem [resolvable:$true] %s220
          %223 = dma.hbm_to_vmem [thread:$0]  %s219, 128, %s221, [#allocation6]
        $region24: #{tpu_custom_call.1} parent=11 // pred_fallthru
          _
        // Predicated region
        $region25: #{tpu_custom_call.1} parent=11 // pred_check
          %p224 = pneg %p156
        $region26: #{tpu_custom_call.1} parent=11 // pred_check_branch
          %226 = sbr.rel (%p224) target = $region28
        $region27: #{tpu_custom_call.1} parent=11 // pred_region
          %228 = vsyncadd [#allocation9], 0
          %s230 = sshll.u32 %s5, 4
          %s231 = int_to_ptr.hbm [resolvable:$true] %s230
          %s232 = sshll.u32 [#allocation8], 4
          %s233 = int_to_ptr.vmem [resolvable:$true] %s232
          %235 = dma.hbm_to_vmem [thread:$0]  %s231, 128, %s233, [#allocation9]
        $region28: #{tpu_custom_call.1} parent=11 // pred_fallthru
          _
      $region12: #{tpu_custom_call.1} parent=5 // pred_fallthru
        _
      %p236 = scmp.lt.s32.totalorder %s20, 2
      // Predicated region
      $region29: #{tpu_custom_call.1} parent=5 // pred_check
        %p237 = pneg %p236
      $region30: #{tpu_custom_call.1} parent=5 // pred_check_branch
        %239 = sbr.rel (%p237) target = $region32
      $region31: #{tpu_custom_call.1} parent=5 // pred_region
        // Predicated region
        $region33: #{tpu_custom_call.1} parent=31 // pred_check
          %p240 = pneg %p40
        $region34: #{tpu_custom_call.1} parent=31 // pred_check_branch
          %242 = sbr.rel (%p240) target = $region36
        $region35: #{tpu_custom_call.1} parent=31 // pred_region
          %s243 = sand.u32 %s30, 1
          %s244 = scalar_lea.sflag [#allocation3], %s243
          %s245 = sand.u32 %s30, 1
          %s246 = smul.addr %s245, 32
          %s247 = scalar_lea.vmem [#allocation2], %s246
          %s248 = smul.u32 4, %s20
          %250 = vsyncadd %s244, 0
          %s251 = smul.addr %s248, 8
          %s252 = scalar_lea.hbm %s0, %s251
          %s254 = sshll.u32 %s252, 4
          %s255 = int_to_ptr.hbm [resolvable:$true] %s254
          %s256 = sshll.u32 %s247, 4
          %s257 = int_to_ptr.vmem [resolvable:$true] %s256
          %259 = dma.hbm_to_vmem [thread:$0]  %s255, 512, %s257, %s244
        $region36: #{tpu_custom_call.1} parent=31 // pred_fallthru
          _
        // Predicated region
        $region37: #{tpu_custom_call.1} parent=31 // pred_check
          %p260 = pneg %p66
        $region38: #{tpu_custom_call.1} parent=31 // pred_check_branch
          %262 = sbr.rel (%p260) target = $region40
        $region39: #{tpu_custom_call.1} parent=31 // pred_region
          %p263 = scmp.lt.s32.totalorder %s20, 1
          %s264 = scalar_select %p263, %s20, 1
          %s265 = smul.addr %s264, 8
          %s266 = scalar_lea.vmem %s1, %s265
        $region40: #{tpu_custom_call.1} parent=31 // pred_fallthru
          _
      $region32: #{tpu_custom_call.1} parent=5 // pred_fallthru
        _
      %p267 = scmp.le.s32.totalorder 1, %s20
      %p268 = scmp.lt.s32.totalorder %s20, 3
      %p269 = pnand %p267, %p268
      %p270 = pneg %p269
      // Predicated region
      $region41: #{tpu_custom_call.1} parent=5 // pred_check
        _
      $region42: #{tpu_custom_call.1} parent=5 // pred_check_branch
        %272 = sbr.rel (%p269) target = $region44
      $region43: #{tpu_custom_call.1} parent=5 // pred_region
        %s273 = ssub.s32 %s20, 1
        %s274 = sand.u32 %s33, 1
        %s275 = scalar_lea.sflag [#allocation3], %s274
        %s276 = sand.u32 %s33, 1
        %s277 = smul.addr %s276, 32
        %s278 = scalar_lea.vmem [#allocation2], %s277
        // Predicated region
        $region45: #{tpu_custom_call.1} parent=43 // pred_check
          %p279 = pneg %p46
        $region46: #{tpu_custom_call.1} parent=43 // pred_check_branch
          %281 = sbr.rel (%p279) target = $region48
        $region47: #{tpu_custom_call.1} parent=43 // pred_region
          %283 = dma.done %s275, 512
        $region48: #{tpu_custom_call.1} parent=43 // pred_fallthru
          _
        // Predicated region
        $region49: #{tpu_custom_call.1} parent=43 // pred_check
          %p284 = pneg %p93
        $region50: #{tpu_custom_call.1} parent=43 // pred_check_branch
          %286 = sbr.rel (%p284) target = $region52
        $region51: #{tpu_custom_call.1} parent=43 // pred_region
          %288 = dma.done [#allocation6], 128
        $region52: #{tpu_custom_call.1} parent=43 // pred_fallthru
          _
        // Predicated region
        $region53: #{tpu_custom_call.1} parent=43 // pred_check
          %p289 = pneg %p135
        $region54: #{tpu_custom_call.1} parent=43 // pred_check_branch
          %291 = sbr.rel (%p289) target = $region56
        $region55: #{tpu_custom_call.1} parent=43 // pred_region
          %293 = dma.done [#allocation6], 128
        $region56: #{tpu_custom_call.1} parent=43 // pred_fallthru
          _
        // Predicated region
        $region57: #{tpu_custom_call.1} parent=43 // pred_check
          %p294 = pneg %p156
        $region58: #{tpu_custom_call.1} parent=43 // pred_check_branch
          %296 = sbr.rel (%p294) target = $region60
        $region59: #{tpu_custom_call.1} parent=43 // pred_region
          %298 = dma.done [#allocation9], 128
        $region60: #{tpu_custom_call.1} parent=43 // pred_fallthru
          _
        %s299 = sand.u32 %s33, 1
        %s300 = scalar_lea.sflag [#allocation3], %s299
        %s301 = sand.u32 %s33, 1
        %s302 = smul.addr %s301, 32
        %s303 = scalar_lea.vmem [#allocation2], %s302
        %p304 = pneg %p46
        %p305 = pneg %p43
        %p306 = scmp.lt.s32.totalorder %s25, 1
        %s307 = scalar_select %p306, %s25, 1
        %s308 = smul.addr %s307, 8
        %s309 = scalar_lea.vmem %s1, %s308
        %p310 = pneg %p72
        %p311 = pneg %p69
        %p312 = pneg %p93
        %p313 = pneg %p90
        %p314 = pneg %p114
        %p315 = pneg %p111
        %p316 = pneg %p135
        %p317 = pneg %p132
        %p318 = pneg %p156
        %p319 = pneg %p153
        %p320 = pneg %p182
        %p321 = pneg %p179
        %s322 = sand.u32 %s169, 1
        %s323 = scalar_lea.sflag [#allocation4], %s322
        %s324 = sand.u32 %s169, 1
        %s325 = smul.addr %s324, 32
        %s326 = scalar_lea.vmem [#allocation10], %s325
        %s327 = smul.u32 4, %s25
        %p328 = scmp.lt.s32.totalorder %s25, 1
        %s329 = scalar_select %p328, %s25, 1
        %s330 = smul.addr %s329, 8
        %s331 = scalar_lea.vmem %s1, %s330
        %s332 = smul.u32 4, %s25
        %v333 = vld [vmem:[#allocation8] sm:$0xff]
        %v334 = vld [vmem:[#allocation8] sm:$0x1]
        %v335 = vld [vmem:[#allocation5] sm:$0xff]
        %v336 = vld [vmem:[#allocation7] sm:$0xff]
        %v337 = vld [vmem:[%s278] sm:$0xff]
        %v338 = vld [vmem:[%s278 + $0x8] sm:$0xff]
        %v339 = vld [vmem:[%s278 + $0x10] sm:$0xff]
        %v340 = vld [vmem:[%s278 + $0x18] sm:$0xff]
        %v341 = vlaneseq
        %v342 = vshrl.u32 %v341, 7
        %v343 = vlaneseq
        %v344 = vand.u32 %v343, 127
        %v345 = vadd.s32 %v344, 128
        %v346 = vadd.s32 %v344, 256
        %v347 = vadd.s32 %v344, 384
        %v348 = vmul.u32 %v342, 128
        %v349 = vsub.s32 %v344, %v348
        %v350 = vsub.s32 %v345, %v348
        %v351 = vsub.s32 %v346, %v348
        %v352 = vsub.s32 %v347, %v348
        %vm353 = vcmp.ge.s32.totalorder %v349, 0
        %vm354 = vcmp.ge.s32.totalorder %v350, 0
        %vm355 = vcmp.ge.s32.totalorder %v351, 0
        %vm356 = vcmp.ge.s32.totalorder %v352, 0
        %vm357 = vcmp.lt.s32.totalorder %v349, 128
        %vm358 = vcmp.lt.s32.totalorder %v350, 128
        %vm359 = vcmp.lt.s32.totalorder %v351, 128
        %vm360 = vcmp.lt.s32.totalorder %v352, 128
        %vm361 = vmand %vm353, %vm357
        %vm362 = vmand %vm354, %vm358
        %vm363 = vmand %vm355, %vm359
        %vm364 = vmand %vm356, %vm360
        %v365 = vsel %vm361, 1, 0
        %v366 = vsel %vm362, 1, 0
        %v367 = vsel %vm363, 1, 0
        %v368 = vsel %vm364, 1, 0
        %v369 = vcvt.s32.f32 %v365
        %v370 = vcvt.s32.f32 %v366
        %v371 = vcvt.s32.f32 %v367
        %v372 = vcvt.s32.f32 %v368
        %v373 = vsel %vm361, %v349, 0
        %v374 = vsel %vm362, %v350, 0
        %v375 = vsel %vm363, %v351, 0
        %v376 = vsel %vm364, %v352, 0
        %vm377 = vcmask 1043456
        %v378 = vsel %vm377, %v373, 0
        %v379 = vrot.slane %v378, 4
        %v380 = vadd.s32 %v378, %v379
        %v381 = vrot.slane %v380, 2
        %v382 = vadd.s32 %v380, %v381
        %v383 = vrot.slane %v382, 1
        %v384 = vadd.s32 %v382, %v383
        %v385 = vsel %vm377, %v374, 0
        %v386 = vrot.slane %v385, 4
        %v387 = vadd.s32 %v385, %v386
        %v388 = vrot.slane %v387, 2
        %v389 = vadd.s32 %v387, %v388
        %v390 = vrot.slane %v389, 1
        %v391 = vadd.s32 %v389, %v390
        %v392 = vsel %vm377, %v375, 0
        %v393 = vrot.slane %v392, 4
        %v394 = vadd.s32 %v392, %v393
        %v395 = vrot.slane %v394, 2
        %v396 = vadd.s32 %v394, %v395
        %v397 = vrot.slane %v396, 1
        %v398 = vadd.s32 %v396, %v397
        %v399 = vsel %vm377, %v376, 0
        %v400 = vrot.slane %v399, 4
        %v401 = vadd.s32 %v399, %v400
        %v402 = vrot.slane %v401, 2
        %v403 = vadd.s32 %v401, %v402
        %v404 = vrot.slane %v403, 1
        %v405 = vadd.s32 %v403, %v404
        %vm406 = vcmp.lt.s32.totalorder %v384, 128
        %vm407 = vcmp.lt.s32.totalorder %v391, 128
        %vm408 = vcmp.lt.s32.totalorder %v398, 128
        %vm409 = vcmp.lt.s32.totalorder %v405, 128
        %v410 = vld [vmem:[%s331] sm:$0xff]
        %vm411 = vcmask 31744
        %v413 = vsel %vm411, %v410, 0
        %v416 = vsel %vm377, %v369, 0
        %v419 = vsel %vm377, %v370, 0
        %v422 = vsel %vm377, %v371, 0
        %v425 = vsel %vm377, %v372, 0
        %427 = vmatpush.msra.mxu0 0.0
        %428 = vmatpush.msra.mxu0 0.0
        %429 = vmatpush.msra.mxu0 0.0
        %430 = vmatpush.msra.mxu0 0.0
        %431 = vmatpush.msra.mxu0 0.0
        %432 = vmatpush.msra.mxu0 0.0
        %433 = vmatpush.msra.mxu0 0.0
        %434 = vmatpush.msra.mxu0 0.0
        %435 = vmatpush.msra.mxu0 0.0
        %436 = vmatpush.msra.mxu0 0.0
        %437 = vmatpush.msra.mxu0 0.0
        %438 = vmatpush.msra.mxu0 0.0
        %439 = vmatpush.msra.mxu0 0.0
        %440 = vmatpush.msra.mxu0 0.0
        %441 = vmatpush.msra.mxu0 0.0
        %442 = vmatpush.msra.mxu0 %v416
        %443 = vmatmul.f32.gmra.mxu0 %v413
        %v444 = vpop.f32.mrf.mxu0
        %v445 = vadd.f32 0.0, %v444
        %446 = vdwg.mxu0
        %447 = vmatpush.msra.mxu0 0.0
        %448 = vmatpush.msra.mxu0 0.0
        %449 = vmatpush.msra.mxu0 0.0
        %450 = vmatpush.msra.mxu0 0.0
        %451 = vmatpush.msra.mxu0 0.0
        %452 = vmatpush.msra.mxu0 0.0
        %453 = vmatpush.msra.mxu0 0.0
        %454 = vmatpush.msra.mxu0 0.0
        %455 = vmatpush.msra.mxu0 0.0
        %456 = vmatpush.msra.mxu0 0.0
        %457 = vmatpush.msra.mxu0 0.0
        %458 = vmatpush.msra.mxu0 0.0
        %459 = vmatpush.msra.mxu0 0.0
        %460 = vmatpush.msra.mxu0 0.0
        %461 = vmatpush.msra.mxu0 0.0
        %462 = vmatpush.msra.mxu0 %v419
        %463 = vmatmul.f32.gmra.mxu0 %v413
        %v464 = vpop.f32.mrf.mxu0
        %v465 = vadd.f32 0.0, %v464
        %466 = vdwg.mxu0
        %467 = vmatpush.msra.mxu0 0.0
        %468 = vmatpush.msra.mxu0 0.0
        %469 = vmatpush.msra.mxu0 0.0
        %470 = vmatpush.msra.mxu0 0.0
        %471 = vmatpush.msra.mxu0 0.0
        %472 = vmatpush.msra.mxu0 0.0
        %473 = vmatpush.msra.mxu0 0.0
        %474 = vmatpush.msra.mxu0 0.0
        %475 = vmatpush.msra.mxu0 0.0
        %476 = vmatpush.msra.mxu0 0.0
        %477 = vmatpush.msra.mxu0 0.0
        %478 = vmatpush.msra.mxu0 0.0
        %479 = vmatpush.msra.mxu0 0.0
        %480 = vmatpush.msra.mxu0 0.0
        %481 = vmatpush.msra.mxu0 0.0
        %482 = vmatpush.msra.mxu0 %v422
        %483 = vmatmul.f32.gmra.mxu0 %v413
        %v484 = vpop.f32.mrf.mxu0
        %v485 = vadd.f32 0.0, %v484
        %486 = vdwg.mxu0
        %487 = vmatpush.msra.mxu0 0.0
        %488 = vmatpush.msra.mxu0 0.0
        %489 = vmatpush.msra.mxu0 0.0
        %490 = vmatpush.msra.mxu0 0.0
        %491 = vmatpush.msra.mxu0 0.0
        %492 = vmatpush.msra.mxu0 0.0
        %493 = vmatpush.msra.mxu0 0.0
        %494 = vmatpush.msra.mxu0 0.0
        %495 = vmatpush.msra.mxu0 0.0
        %496 = vmatpush.msra.mxu0 0.0
        %497 = vmatpush.msra.mxu0 0.0
        %498 = vmatpush.msra.mxu0 0.0
        %499 = vmatpush.msra.mxu0 0.0
        %500 = vmatpush.msra.mxu0 0.0
        %501 = vmatpush.msra.mxu0 0.0
        %502 = vmatpush.msra.mxu0 %v425
        %503 = vmatmul.f32.gmra.mxu0 %v413
        %v504 = vpop.f32.mrf.mxu0
        %v505 = vadd.f32 0.0, %v504
        %506 = vdwg.mxu0
        %vm507 = vcmask 64512
        %v509 = vsel %vm507, %v335, 0
        %511 = vmatpush.msra.mxu0 0.0
        %512 = vmatpush.msra.mxu0 0.0
        %513 = vmatpush.msra.mxu0 0.0
        %514 = vmatpush.msra.mxu0 0.0
        %515 = vmatpush.msra.mxu0 0.0
        %516 = vmatpush.msra.mxu0 0.0
        %517 = vmatpush.msra.mxu0 0.0
        %518 = vmatpush.msra.mxu0 0.0
        %519 = vmatpush.msra.mxu0 0.0
        %520 = vmatpush.msra.mxu0 0.0
        %521 = vmatpush.msra.mxu0 0.0
        %522 = vmatpush.msra.mxu0 0.0
        %523 = vmatpush.msra.mxu0 0.0
        %524 = vmatpush.msra.mxu0 0.0
        %525 = vmatpush.msra.mxu0 0.0
        %526 = vmatpush.msra.mxu0 %v337
        %527 = vmatmul.f32.gmra.mxu0 %v509
        %v528 = vpop.f32.mrf.mxu0
        %v529 = vadd.f32 %v445, %v528
        %530 = vdwg.mxu0
        %531 = vmatpush.msra.mxu0 0.0
        %532 = vmatpush.msra.mxu0 0.0
        %533 = vmatpush.msra.mxu0 0.0
        %534 = vmatpush.msra.mxu0 0.0
        %535 = vmatpush.msra.mxu0 0.0
        %536 = vmatpush.msra.mxu0 0.0
        %537 = vmatpush.msra.mxu0 0.0
        %538 = vmatpush.msra.mxu0 0.0
        %539 = vmatpush.msra.mxu0 0.0
        %540 = vmatpush.msra.mxu0 0.0
        %541 = vmatpush.msra.mxu0 0.0
        %542 = vmatpush.msra.mxu0 0.0
        %543 = vmatpush.msra.mxu0 0.0
        %544 = vmatpush.msra.mxu0 0.0
        %545 = vmatpush.msra.mxu0 0.0
        %546 = vmatpush.msra.mxu0 %v338
        %547 = vmatmul.f32.gmra.mxu0 %v509
        %v548 = vpop.f32.mrf.mxu0
        %v549 = vadd.f32 %v465, %v548
        %550 = vdwg.mxu0
        %551 = vmatpush.msra.mxu0 0.0
        %552 = vmatpush.msra.mxu0 0.0
        %553 = vmatpush.msra.mxu0 0.0
        %554 = vmatpush.msra.mxu0 0.0
        %555 = vmatpush.msra.mxu0 0.0
        %556 = vmatpush.msra.mxu0 0.0
        %557 = vmatpush.msra.mxu0 0.0
        %558 = vmatpush.msra.mxu0 0.0
        %559 = vmatpush.msra.mxu0 0.0
        %560 = vmatpush.msra.mxu0 0.0
        %561 = vmatpush.msra.mxu0 0.0
        %562 = vmatpush.msra.mxu0 0.0
        %563 = vmatpush.msra.mxu0 0.0
        %564 = vmatpush.msra.mxu0 0.0
        %565 = vmatpush.msra.mxu0 0.0
        %566 = vmatpush.msra.mxu0 %v339
        %567 = vmatmul.f32.gmra.mxu0 %v509
        %v568 = vpop.f32.mrf.mxu0
        %v569 = vadd.f32 %v485, %v568
        %570 = vdwg.mxu0
        %571 = vmatpush.msra.mxu0 0.0
        %572 = vmatpush.msra.mxu0 0.0
        %573 = vmatpush.msra.mxu0 0.0
        %574 = vmatpush.msra.mxu0 0.0
        %575 = vmatpush.msra.mxu0 0.0
        %576 = vmatpush.msra.mxu0 0.0
        %577 = vmatpush.msra.mxu0 0.0
        %578 = vmatpush.msra.mxu0 0.0
        %579 = vmatpush.msra.mxu0 0.0
        %580 = vmatpush.msra.mxu0 0.0
        %581 = vmatpush.msra.mxu0 0.0
        %582 = vmatpush.msra.mxu0 0.0
        %583 = vmatpush.msra.mxu0 0.0
        %584 = vmatpush.msra.mxu0 0.0
        %585 = vmatpush.msra.mxu0 0.0
        %586 = vmatpush.msra.mxu0 %v340
        %587 = vmatmul.f32.gmra.mxu0 %v509
        %v588 = vpop.f32.mrf.mxu0
        %v589 = vadd.f32 %v505, %v588
        %590 = vdwg.mxu0
        %vm591 = vcmp.ge.f32.partialorder %v529, 0.0
        %vm592 = vcmp.ge.f32.partialorder %v549, 0.0
        %vm593 = vcmp.ge.f32.partialorder %v569, 0.0
        %vm594 = vcmp.ge.f32.partialorder %v589, 0.0
        %596 = vrot.lane.b32.xlu0 %v334, 122
        %v597 = vpop.permute.xlu0 %596
        %s598 = vtos %v597
        %v599 = vstv %s598
        %v601 = vmul.f32 %v599, %v529
        %v602 = vmul.f32 %v599, %v549
        %v603 = vmul.f32 %v599, %v569
        %v604 = vmul.f32 %v599, %v589
        %v605 = vsel %vm591, %v529, %v601
        %v606 = vsel %vm592, %v549, %v602
        %v607 = vsel %vm593, %v569, %v603
        %v608 = vsel %vm594, %v589, %v604
        %v609 = vsel %vm406, 1, 0
        %v610 = vsel %vm407, 1, 0
        %v611 = vsel %vm408, 1, 0
        %v612 = vsel %vm409, 1, 0
        %vm613 = vcmp.eq.s32.totalorder %v609, 1
        %vm614 = vcmp.eq.s32.totalorder %v610, 1
        %vm615 = vcmp.eq.s32.totalorder %v611, 1
        %vm616 = vcmp.eq.s32.totalorder %v612, 1
        %v617 = vsel %vm613, %v605, 0.0
        %v618 = vsel %vm614, %v606, 0.0
        %v619 = vsel %vm615, %v607, 0.0
        %v620 = vsel %vm616, %v608, 0.0
        %v621 = vrot.slane %v617, 4
        %v622 = vadd.f32 %v617, %v621
        %v623 = vrot.slane %v622, 2
        %v624 = vadd.f32 %v622, %v623
        %v625 = vrot.slane %v624, 1
        %v626 = vadd.f32 %v624, %v625
        %v627 = vrot.slane %v618, 4
        %v628 = vadd.f32 %v618, %v627
        %v629 = vrot.slane %v628, 2
        %v630 = vadd.f32 %v628, %v629
        %v631 = vrot.slane %v630, 1
        %v632 = vadd.f32 %v630, %v631
        %v633 = vrot.slane %v619, 4
        %v634 = vadd.f32 %v619, %v633
        %v635 = vrot.slane %v634, 2
        %v636 = vadd.f32 %v634, %v635
        %v637 = vrot.slane %v636, 1
        %v638 = vadd.f32 %v636, %v637
        %v639 = vrot.slane %v620, 4
        %v640 = vadd.f32 %v620, %v639
        %v641 = vrot.slane %v640, 2
        %v642 = vadd.f32 %v640, %v641
        %v643 = vrot.slane %v642, 1
        %v644 = vadd.f32 %v642, %v643
        %v645 = vmul.f32 %v617, %v617
        %v646 = vmul.f32 %v618, %v618
        %v647 = vmul.f32 %v619, %v619
        %v648 = vmul.f32 %v620, %v620
        %v649 = vrot.slane %v645, 4
        %v650 = vadd.f32 %v645, %v649
        %v651 = vrot.slane %v650, 2
        %v652 = vadd.f32 %v650, %v651
        %v653 = vrot.slane %v652, 1
        %v654 = vadd.f32 %v652, %v653
        %v655 = vrot.slane %v646, 4
        %v656 = vadd.f32 %v646, %v655
        %v657 = vrot.slane %v656, 2
        %v658 = vadd.f32 %v656, %v657
        %v659 = vrot.slane %v658, 1
        %v660 = vadd.f32 %v658, %v659
        %v661 = vrot.slane %v647, 4
        %v662 = vadd.f32 %v647, %v661
        %v663 = vrot.slane %v662, 2
        %v664 = vadd.f32 %v662, %v663
        %v665 = vrot.slane %v664, 1
        %v666 = vadd.f32 %v664, %v665
        %v667 = vrot.slane %v648, 4
        %v668 = vadd.f32 %v648, %v667
        %v669 = vrot.slane %v668, 2
        %v670 = vadd.f32 %v668, %v669
        %v671 = vrot.slane %v670, 1
        %v672 = vadd.f32 %v670, %v671
        %vm673 = vcmask 1040384
        %v674 = vsel %vm673, %v626, %v654
        %v675 = vsel %vm673, %v632, %v660
        %v676 = vsel %vm673, %v638, %v666
        %v677 = vsel %vm673, %v644, %v672
        %678 = vmatpush.xpose.msra.mxu0 0.0
        %679 = vmatpush.xpose.msra.mxu0 0.0
        %680 = vmatpush.xpose.msra.mxu0 0.0
        %681 = vmatpush.xpose.msra.mxu0 0.0
        %682 = vmatpush.xpose.msra.mxu0 0.0
        %683 = vmatpush.xpose.msra.mxu0 0.0
        %684 = vmatpush.xpose.msra.mxu0 0.0
        %685 = vmatpush.xpose.msra.mxu0 0.0
        %686 = vmatpush.xpose.msra.mxu0 0.0
        %687 = vmatpush.xpose.msra.mxu0 0.0
        %688 = vmatpush.xpose.msra.mxu0 0.0
        %689 = vmatpush.xpose.msra.mxu0 0.0
        %690 = vmatpush.xpose.msra.mxu0 0.0
        %691 = vmatpush.xpose.msra.mxu0 0.0
        %692 = vmatpush.xpose.msra.mxu0 0.0
        %693 = vmatpush.xpose.msra.mxu0 %v369
        %694 = vmatmul.f32.gmra.mxu0 %v674
        %v695 = vpop.f32.mrf.mxu0
        %v696 = vadd.f32 0.0, %v695
        %697 = vdwg.mxu0
        %698 = vmatpush.xpose.msra.mxu0 0.0
        %699 = vmatpush.xpose.msra.mxu0 0.0
        %700 = vmatpush.xpose.msra.mxu0 0.0
        %701 = vmatpush.xpose.msra.mxu0 0.0
        %702 = vmatpush.xpose.msra.mxu0 0.0
        %703 = vmatpush.xpose.msra.mxu0 0.0
        %704 = vmatpush.xpose.msra.mxu0 0.0
        %705 = vmatpush.xpose.msra.mxu0 0.0
        %706 = vmatpush.xpose.msra.mxu0 0.0
        %707 = vmatpush.xpose.msra.mxu0 0.0
        %708 = vmatpush.xpose.msra.mxu0 0.0
        %709 = vmatpush.xpose.msra.mxu0 0.0
        %710 = vmatpush.xpose.msra.mxu0 0.0
        %711 = vmatpush.xpose.msra.mxu0 0.0
        %712 = vmatpush.xpose.msra.mxu0 0.0
        %713 = vmatpush.xpose.msra.mxu0 %v370
        %714 = vmatmul.f32.gmra.mxu0 %v675
        %v715 = vpop.f32.mrf.mxu0
        %v716 = vadd.f32 %v696, %v715
        %717 = vdwg.mxu0
        %718 = vmatpush.xpose.msra.mxu0 0.0
        %719 = vmatpush.xpose.msra.mxu0 0.0
        %720 = vmatpush.xpose.msra.mxu0 0.0
        %721 = vmatpush.xpose.msra.mxu0 0.0
        %722 = vmatpush.xpose.msra.mxu0 0.0
        %723 = vmatpush.xpose.msra.mxu0 0.0
        %724 = vmatpush.xpose.msra.mxu0 0.0
        %725 = vmatpush.xpose.msra.mxu0 0.0
        %726 = vmatpush.xpose.msra.mxu0 0.0
        %727 = vmatpush.xpose.msra.mxu0 0.0
        %728 = vmatpush.xpose.msra.mxu0 0.0
        %729 = vmatpush.xpose.msra.mxu0 0.0
        %730 = vmatpush.xpose.msra.mxu0 0.0
        %731 = vmatpush.xpose.msra.mxu0 0.0
        %732 = vmatpush.xpose.msra.mxu0 0.0
        %733 = vmatpush.xpose.msra.mxu0 %v371
        %734 = vmatmul.f32.gmra.mxu0 %v676
        %v735 = vpop.f32.mrf.mxu0
        %v736 = vadd.f32 %v716, %v735
        %737 = vdwg.mxu0
        %738 = vmatpush.xpose.msra.mxu0 0.0
        %739 = vmatpush.xpose.msra.mxu0 0.0
        %740 = vmatpush.xpose.msra.mxu0 0.0
        %741 = vmatpush.xpose.msra.mxu0 0.0
        %742 = vmatpush.xpose.msra.mxu0 0.0
        %743 = vmatpush.xpose.msra.mxu0 0.0
        %744 = vmatpush.xpose.msra.mxu0 0.0
        %745 = vmatpush.xpose.msra.mxu0 0.0
        %746 = vmatpush.xpose.msra.mxu0 0.0
        %747 = vmatpush.xpose.msra.mxu0 0.0
        %748 = vmatpush.xpose.msra.mxu0 0.0
        %749 = vmatpush.xpose.msra.mxu0 0.0
        %750 = vmatpush.xpose.msra.mxu0 0.0
        %751 = vmatpush.xpose.msra.mxu0 0.0
        %752 = vmatpush.xpose.msra.mxu0 0.0
        %753 = vmatpush.xpose.msra.mxu0 %v372
        %754 = vmatmul.f32.gmra.mxu0 %v677
        %v755 = vpop.f32.mrf.mxu0
        %v756 = vadd.f32 %v736, %v755
        %757 = vdwg.mxu0
        %v758 = vmul.f32 %v756, 0.0009765625
        %v759 = vmul.f32 %v758, %v758
        %v761 = vrot.slane %v759, 7
        %v763 = vsub.f32 %v758, %v761
        %v764 = vmax.f32 %v763, 0.0
        %v765 = vadd.f32 %v764, 1e-06
        %v766 = vrsqrt.pop %v765
        %v767 = vmul.f32 %v766, %v765
        %v768 = vmul.f32 %v767, %v766
        %v769 = vmul.f32 0.5, %v768
        %v770 = vsub.f32 1.5, %v769
        %v771 = vmul.f32 %v766, %v770
        %vm772 = vweird.f32 %v765
        %vm773 = vweird.f32 %v766
        %vm774 = vmor %vm772, %vm773
        %v775 = vsel %vm774, %v766, %v771
        %v777 = vrot.slane %v775, 1
        %v779 = vmul.f32 %v758, %v777
        %v781 = vrot.slane %v779, 7
        %v783 = vsel %vm673, %v777, %v781
        %v785 = vsel %vm411, %v783, 0
        %787 = vmatpush.msra.mxu0 0.0
        %788 = vmatpush.msra.mxu0 0.0
        %789 = vmatpush.msra.mxu0 0.0
        %790 = vmatpush.msra.mxu0 0.0
        %791 = vmatpush.msra.mxu0 0.0
        %792 = vmatpush.msra.mxu0 0.0
        %793 = vmatpush.msra.mxu0 0.0
        %794 = vmatpush.msra.mxu0 0.0
        %795 = vmatpush.msra.mxu0 0.0
        %796 = vmatpush.msra.mxu0 0.0
        %797 = vmatpush.msra.mxu0 0.0
        %798 = vmatpush.msra.mxu0 0.0
        %799 = vmatpush.msra.mxu0 0.0
        %800 = vmatpush.msra.mxu0 0.0
        %801 = vmatpush.msra.mxu0 0.0
        %802 = vmatpush.msra.mxu0 %v416
        %803 = vmatmul.f32.gmra.mxu0 %v785
        %v804 = vpop.f32.mrf.mxu0
        %v805 = vadd.f32 0.0, %v804
        %806 = vdwg.mxu0
        %807 = vmatpush.msra.mxu0 0.0
        %808 = vmatpush.msra.mxu0 0.0
        %809 = vmatpush.msra.mxu0 0.0
        %810 = vmatpush.msra.mxu0 0.0
        %811 = vmatpush.msra.mxu0 0.0
        %812 = vmatpush.msra.mxu0 0.0
        %813 = vmatpush.msra.mxu0 0.0
        %814 = vmatpush.msra.mxu0 0.0
        %815 = vmatpush.msra.mxu0 0.0
        %816 = vmatpush.msra.mxu0 0.0
        %817 = vmatpush.msra.mxu0 0.0
        %818 = vmatpush.msra.mxu0 0.0
        %819 = vmatpush.msra.mxu0 0.0
        %820 = vmatpush.msra.mxu0 0.0
        %821 = vmatpush.msra.mxu0 0.0
        %822 = vmatpush.msra.mxu0 %v419
        %823 = vmatmul.f32.gmra.mxu0 %v785
        %v824 = vpop.f32.mrf.mxu0
        %v825 = vadd.f32 0.0, %v824
        %826 = vdwg.mxu0
        %827 = vmatpush.msra.mxu0 0.0
        %828 = vmatpush.msra.mxu0 0.0
        %829 = vmatpush.msra.mxu0 0.0
        %830 = vmatpush.msra.mxu0 0.0
        %831 = vmatpush.msra.mxu0 0.0
        %832 = vmatpush.msra.mxu0 0.0
        %833 = vmatpush.msra.mxu0 0.0
        %834 = vmatpush.msra.mxu0 0.0
        %835 = vmatpush.msra.mxu0 0.0
        %836 = vmatpush.msra.mxu0 0.0
        %837 = vmatpush.msra.mxu0 0.0
        %838 = vmatpush.msra.mxu0 0.0
        %839 = vmatpush.msra.mxu0 0.0
        %840 = vmatpush.msra.mxu0 0.0
        %841 = vmatpush.msra.mxu0 0.0
        %842 = vmatpush.msra.mxu0 %v422
        %843 = vmatmul.f32.gmra.mxu0 %v785
        %v844 = vpop.f32.mrf.mxu0
        %v845 = vadd.f32 0.0, %v844
        %846 = vdwg.mxu0
        %847 = vmatpush.msra.mxu0 0.0
        %848 = vmatpush.msra.mxu0 0.0
        %849 = vmatpush.msra.mxu0 0.0
        %850 = vmatpush.msra.mxu0 0.0
        %851 = vmatpush.msra.mxu0 0.0
        %852 = vmatpush.msra.mxu0 0.0
        %853 = vmatpush.msra.mxu0 0.0
        %854 = vmatpush.msra.mxu0 0.0
        %855 = vmatpush.msra.mxu0 0.0
        %856 = vmatpush.msra.mxu0 0.0
        %857 = vmatpush.msra.mxu0 0.0
        %858 = vmatpush.msra.mxu0 0.0
        %859 = vmatpush.msra.mxu0 0.0
        %860 = vmatpush.msra.mxu0 0.0
        %861 = vmatpush.msra.mxu0 0.0
        %862 = vmatpush.msra.mxu0 %v425
        %863 = vmatmul.f32.gmra.mxu0 %v785
        %v864 = vpop.f32.mrf.mxu0
        %v865 = vadd.f32 0.0, %v864
        %866 = vdwg.mxu0
        %v867 = vperm.slane %v805, 0
        %v868 = vperm.slane %v825, 0
        %v869 = vperm.slane %v845, 0
        %v870 = vperm.slane %v865, 0
        %v871 = vmul.f32 %v617, %v867
        %v872 = vmul.f32 %v618, %v868
        %v873 = vmul.f32 %v619, %v869
        %v874 = vmul.f32 %v620, %v870
        %v875 = vperm.slane %v805, 1
        %v876 = vperm.slane %v825, 1
        %v877 = vperm.slane %v845, 1
        %v878 = vperm.slane %v865, 1
        %v879 = vsub.f32 %v871, %v875
        %v880 = vsub.f32 %v872, %v876
        %v881 = vsub.f32 %v873, %v877
        %v882 = vsub.f32 %v874, %v878
        %884 = vset.pattern.permute.xlu0 0
        %885 = vperm.xlu0 %884, %v333
        %v886 = vpop.permute.xlu0 %885
        %v888 = vmul.f32 %v886, %v879
        %v889 = vmul.f32 %v886, %v880
        %v890 = vmul.f32 %v886, %v881
        %v891 = vmul.f32 %v886, %v882
        %892 = vset.pattern.permute.xlu0 1
        %893 = vperm.xlu0 %892, %v333
        %v894 = vpop.permute.xlu0 %893
        %v896 = vadd.f32 %v888, %v894
        %v897 = vadd.f32 %v889, %v894
        %v898 = vadd.f32 %v890, %v894
        %v899 = vadd.f32 %v891, %v894
        %v900 = vld [vmem:[%s3] sm:$0xff]
        %901 = vset.pattern.permute.xlu0 2
        %902 = vperm.xlu0 %901, %v333
        %v903 = vpop.permute.xlu0 %902
        %v906 = vsel %vm507, %v900, 0
        %908 = vmatpush.msra.mxu0 0.0
        %909 = vmatpush.msra.mxu0 0.0
        %910 = vmatpush.msra.mxu0 0.0
        %911 = vmatpush.msra.mxu0 0.0
        %912 = vmatpush.msra.mxu0 0.0
        %913 = vmatpush.msra.mxu0 0.0
        %914 = vmatpush.msra.mxu0 0.0
        %915 = vmatpush.msra.mxu0 0.0
        %916 = vmatpush.msra.mxu0 0.0
        %917 = vmatpush.msra.mxu0 0.0
        %918 = vmatpush.msra.mxu0 0.0
        %919 = vmatpush.msra.mxu0 0.0
        %920 = vmatpush.msra.mxu0 0.0
        %921 = vmatpush.msra.mxu0 0.0
        %922 = vmatpush.msra.mxu0 0.0
        %923 = vmatpush.msra.mxu0 %v896
        %924 = vmatmul.f32.gmra.mxu0 %v906
        %v925 = vpop.f32.mrf.mxu0
        %v926 = vadd.f32 %v903, %v925
        %927 = vdwg.mxu0
        %928 = vmatpush.msra.mxu0 0.0
        %929 = vmatpush.msra.mxu0 0.0
        %930 = vmatpush.msra.mxu0 0.0
        %931 = vmatpush.msra.mxu0 0.0
        %932 = vmatpush.msra.mxu0 0.0
        %933 = vmatpush.msra.mxu0 0.0
        %934 = vmatpush.msra.mxu0 0.0
        %935 = vmatpush.msra.mxu0 0.0
        %936 = vmatpush.msra.mxu0 0.0
        %937 = vmatpush.msra.mxu0 0.0
        %938 = vmatpush.msra.mxu0 0.0
        %939 = vmatpush.msra.mxu0 0.0
        %940 = vmatpush.msra.mxu0 0.0
        %941 = vmatpush.msra.mxu0 0.0
        %942 = vmatpush.msra.mxu0 0.0
        %943 = vmatpush.msra.mxu0 %v897
        %944 = vmatmul.f32.gmra.mxu0 %v906
        %v945 = vpop.f32.mrf.mxu0
        %v946 = vadd.f32 %v903, %v945
        %947 = vdwg.mxu0
        %948 = vmatpush.msra.mxu0 0.0
        %949 = vmatpush.msra.mxu0 0.0
        %950 = vmatpush.msra.mxu0 0.0
        %951 = vmatpush.msra.mxu0 0.0
        %952 = vmatpush.msra.mxu0 0.0
        %953 = vmatpush.msra.mxu0 0.0
        %954 = vmatpush.msra.mxu0 0.0
        %955 = vmatpush.msra.mxu0 0.0
        %956 = vmatpush.msra.mxu0 0.0
        %957 = vmatpush.msra.mxu0 0.0
        %958 = vmatpush.msra.mxu0 0.0
        %959 = vmatpush.msra.mxu0 0.0
        %960 = vmatpush.msra.mxu0 0.0
        %961 = vmatpush.msra.mxu0 0.0
        %962 = vmatpush.msra.mxu0 0.0
        %963 = vmatpush.msra.mxu0 %v898
        %964 = vmatmul.f32.gmra.mxu0 %v906
        %v965 = vpop.f32.mrf.mxu0
        %v966 = vadd.f32 %v903, %v965
        %967 = vdwg.mxu0
        %968 = vmatpush.msra.mxu0 0.0
        %969 = vmatpush.msra.mxu0 0.0
        %970 = vmatpush.msra.mxu0 0.0
        %971 = vmatpush.msra.mxu0 0.0
        %972 = vmatpush.msra.mxu0 0.0
        %973 = vmatpush.msra.mxu0 0.0
        %974 = vmatpush.msra.mxu0 0.0
        %975 = vmatpush.msra.mxu0 0.0
        %976 = vmatpush.msra.mxu0 0.0
        %977 = vmatpush.msra.mxu0 0.0
        %978 = vmatpush.msra.mxu0 0.0
        %979 = vmatpush.msra.mxu0 0.0
        %980 = vmatpush.msra.mxu0 0.0
        %981 = vmatpush.msra.mxu0 0.0
        %982 = vmatpush.msra.mxu0 0.0
        %983 = vmatpush.msra.mxu0 %v899
        %984 = vmatmul.f32.gmra.mxu0 %v906
        %v985 = vpop.f32.mrf.mxu0
        %v986 = vadd.f32 %v903, %v985
        %987 = vdwg.mxu0
        %988 = vrot.lane.b32.xlu0 %v896, 126
        %v989 = vpop.permute.xlu0 %988
        %990 = vrot.lane.b32.xlu0 %v897, 126
        %v991 = vpop.permute.xlu0 %990
        %992 = vrot.lane.b32.xlu0 %v898, 126
        %v993 = vpop.permute.xlu0 %992
        %994 = vrot.lane.b32.xlu0 %v899, 126
        %v995 = vpop.permute.xlu0 %994
        %vm996 = vcmp.lt.s32.totalorder %v344, 126
        %v997 = vsel %vm996, %v993, %v995
        %v998 = vsel %vm996, %v991, %v993
        %v999 = vsel %vm996, %v989, %v991
        %v1000 = vsel %vm996, %v995, %v989
        %vm1001 = vcmp.lt.s32.totalorder %v384, 126
        %vm1002 = vcmp.lt.s32.totalorder %v391, 126
        %vm1003 = vcmp.lt.s32.totalorder %v398, 126
        %vm1004 = vcmp.lt.s32.totalorder %v405, 126
        %v1005 = vsel %vm1001, 1, 0
        %v1006 = vsel %vm1002, 1, 0
        %v1007 = vsel %vm1003, 1, 0
        %v1008 = vsel %vm1004, 1, 0
        %vm1009 = vcmp.eq.s32.totalorder %v1005, 1
        %vm1010 = vcmp.eq.s32.totalorder %v1006, 1
        %vm1011 = vcmp.eq.s32.totalorder %v1007, 1
        %vm1012 = vcmp.eq.s32.totalorder %v1008, 1
        %v1013 = vsel %vm1009, %v999, 0.0
        %v1014 = vsel %vm1010, %v998, 0.0
        %v1015 = vsel %vm1011, %v997, 0.0
        %v1016 = vsel %vm1012, %v1000, 0.0
        %s1017 = scalar_lea.vmem %s3, 8
        %v1018 = vld [vmem:[%s1017] sm:$0xff]
        %v1020 = vsel %vm507, %v1018, 0
        %1022 = vmatpush.msra.mxu0 0.0
        %1023 = vmatpush.msra.mxu0 0.0
        %1024 = vmatpush.msra.mxu0 0.0
        %1025 = vmatpush.msra.mxu0 0.0
        %1026 = vmatpush.msra.mxu0 0.0
        %1027 = vmatpush.msra.mxu0 0.0
        %1028 = vmatpush.msra.mxu0 0.0
        %1029 = vmatpush.msra.mxu0 0.0
        %1030 = vmatpush.msra.mxu0 0.0
        %1031 = vmatpush.msra.mxu0 0.0
        %1032 = vmatpush.msra.mxu0 0.0
        %1033 = vmatpush.msra.mxu0 0.0
        %1034 = vmatpush.msra.mxu0 0.0
        %1035 = vmatpush.msra.mxu0 0.0
        %1036 = vmatpush.msra.mxu0 0.0
        %1037 = vmatpush.msra.mxu0 %v1013
        %1038 = vmatmul.f32.gmra.mxu0 %v1020
        %v1039 = vpop.f32.mrf.mxu0
        %v1040 = vadd.f32 0.0, %v1039
        %1041 = vdwg.mxu0
        %1042 = vmatpush.msra.mxu0 0.0
        %1043 = vmatpush.msra.mxu0 0.0
        %1044 = vmatpush.msra.mxu0 0.0
        %1045 = vmatpush.msra.mxu0 0.0
        %1046 = vmatpush.msra.mxu0 0.0
        %1047 = vmatpush.msra.mxu0 0.0
        %1048 = vmatpush.msra.mxu0 0.0
        %1049 = vmatpush.msra.mxu0 0.0
        %1050 = vmatpush.msra.mxu0 0.0
        %1051 = vmatpush.msra.mxu0 0.0
        %1052 = vmatpush.msra.mxu0 0.0
        %1053 = vmatpush.msra.mxu0 0.0
        %1054 = vmatpush.msra.mxu0 0.0
        %1055 = vmatpush.msra.mxu0 0.0
        %1056 = vmatpush.msra.mxu0 0.0
        %1057 = vmatpush.msra.mxu0 %v1014
        %1058 = vmatmul.f32.gmra.mxu0 %v1020
        %v1059 = vpop.f32.mrf.mxu0
        %v1060 = vadd.f32 0.0, %v1059
        %1061 = vdwg.mxu0
        %1062 = vmatpush.msra.mxu0 0.0
        %1063 = vmatpush.msra.mxu0 0.0
        %1064 = vmatpush.msra.mxu0 0.0
        %1065 = vmatpush.msra.mxu0 0.0
        %1066 = vmatpush.msra.mxu0 0.0
        %1067 = vmatpush.msra.mxu0 0.0
        %1068 = vmatpush.msra.mxu0 0.0
        %1069 = vmatpush.msra.mxu0 0.0
        %1070 = vmatpush.msra.mxu0 0.0
        %1071 = vmatpush.msra.mxu0 0.0
        %1072 = vmatpush.msra.mxu0 0.0
        %1073 = vmatpush.msra.mxu0 0.0
        %1074 = vmatpush.msra.mxu0 0.0
        %1075 = vmatpush.msra.mxu0 0.0
        %1076 = vmatpush.msra.mxu0 0.0
        %1077 = vmatpush.msra.mxu0 %v1015
        %1078 = vmatmul.f32.gmra.mxu0 %v1020
        %v1079 = vpop.f32.mrf.mxu0
        %v1080 = vadd.f32 0.0, %v1079
        %1081 = vdwg.mxu0
        %1082 = vmatpush.msra.mxu0 0.0
        %1083 = vmatpush.msra.mxu0 0.0
        %1084 = vmatpush.msra.mxu0 0.0
        %1085 = vmatpush.msra.mxu0 0.0
        %1086 = vmatpush.msra.mxu0 0.0
        %1087 = vmatpush.msra.mxu0 0.0
        %1088 = vmatpush.msra.mxu0 0.0
        %1089 = vmatpush.msra.mxu0 0.0
        %1090 = vmatpush.msra.mxu0 0.0
        %1091 = vmatpush.msra.mxu0 0.0
        %1092 = vmatpush.msra.mxu0 0.0
        %1093 = vmatpush.msra.mxu0 0.0
        %1094 = vmatpush.msra.mxu0 0.0
        %1095 = vmatpush.msra.mxu0 0.0
        %1096 = vmatpush.msra.mxu0 0.0
        %1097 = vmatpush.msra.mxu0 %v1016
        %1098 = vmatmul.f32.gmra.mxu0 %v1020
        %v1099 = vpop.f32.mrf.mxu0
        %v1100 = vadd.f32 0.0, %v1099
        %1101 = vdwg.mxu0
        %v1102 = vadd.f32 %v926, %v1040
        %v1103 = vadd.f32 %v946, %v1060
        %v1104 = vadd.f32 %v966, %v1080
        %v1105 = vadd.f32 %v986, %v1100
        %1106 = vrot.lane.b32.xlu0 %v896, 124
        %v1107 = vpop.permute.xlu0 %1106
        %1108 = vrot.lane.b32.xlu0 %v897, 124
        %v1109 = vpop.permute.xlu0 %1108
        %1110 = vrot.lane.b32.xlu0 %v898, 124
        %v1111 = vpop.permute.xlu0 %1110
        %1112 = vrot.lane.b32.xlu0 %v899, 124
        %v1113 = vpop.permute.xlu0 %1112
        %vm1114 = vcmp.lt.s32.totalorder %v344, 124
        %v1115 = vsel %vm1114, %v1111, %v1113
        %v1116 = vsel %vm1114, %v1109, %v1111
        %v1117 = vsel %vm1114, %v1107, %v1109
        %v1118 = vsel %vm1114, %v1113, %v1107
        %vm1119 = vcmp.lt.s32.totalorder %v384, 124
        %vm1120 = vcmp.lt.s32.totalorder %v391, 124
        %vm1121 = vcmp.lt.s32.totalorder %v398, 124
        %vm1122 = vcmp.lt.s32.totalorder %v405, 124
        %v1123 = vsel %vm1119, 1, 0
        %v1124 = vsel %vm1120, 1, 0
        %v1125 = vsel %vm1121, 1, 0
        %v1126 = vsel %vm1122, 1, 0
        %vm1127 = vcmp.eq.s32.totalorder %v1123, 1
        %vm1128 = vcmp.eq.s32.totalorder %v1124, 1
        %vm1129 = vcmp.eq.s32.totalorder %v1125, 1
        %vm1130 = vcmp.eq.s32.totalorder %v1126, 1
        %v1131 = vsel %vm1127, %v1117, 0.0
        %v1132 = vsel %vm1128, %v1116, 0.0
        %v1133 = vsel %vm1129, %v1115, 0.0
        %v1134 = vsel %vm1130, %v1118, 0.0
        %s1135 = scalar_lea.vmem %s3, 16
        %v1136 = vld [vmem:[%s1135] sm:$0xff]
        %v1138 = vsel %vm507, %v1136, 0
        %1140 = vmatpush.msra.mxu0 0.0
        %1141 = vmatpush.msra.mxu0 0.0
        %1142 = vmatpush.msra.mxu0 0.0
        %1143 = vmatpush.msra.mxu0 0.0
        %1144 = vmatpush.msra.mxu0 0.0
        %1145 = vmatpush.msra.mxu0 0.0
        %1146 = vmatpush.msra.mxu0 0.0
        %1147 = vmatpush.msra.mxu0 0.0
        %1148 = vmatpush.msra.mxu0 0.0
        %1149 = vmatpush.msra.mxu0 0.0
        %1150 = vmatpush.msra.mxu0 0.0
        %1151 = vmatpush.msra.mxu0 0.0
        %1152 = vmatpush.msra.mxu0 0.0
        %1153 = vmatpush.msra.mxu0 0.0
        %1154 = vmatpush.msra.mxu0 0.0
        %1155 = vmatpush.msra.mxu0 %v1131
        %1156 = vmatmul.f32.gmra.mxu0 %v1138
        %v1157 = vpop.f32.mrf.mxu0
        %v1158 = vadd.f32 0.0, %v1157
        %1159 = vdwg.mxu0
        %1160 = vmatpush.msra.mxu0 0.0
        %1161 = vmatpush.msra.mxu0 0.0
        %1162 = vmatpush.msra.mxu0 0.0
        %1163 = vmatpush.msra.mxu0 0.0
        %1164 = vmatpush.msra.mxu0 0.0
        %1165 = vmatpush.msra.mxu0 0.0
        %1166 = vmatpush.msra.mxu0 0.0
        %1167 = vmatpush.msra.mxu0 0.0
        %1168 = vmatpush.msra.mxu0 0.0
        %1169 = vmatpush.msra.mxu0 0.0
        %1170 = vmatpush.msra.mxu0 0.0
        %1171 = vmatpush.msra.mxu0 0.0
        %1172 = vmatpush.msra.mxu0 0.0
        %1173 = vmatpush.msra.mxu0 0.0
        %1174 = vmatpush.msra.mxu0 0.0
        %1175 = vmatpush.msra.mxu0 %v1132
        %1176 = vmatmul.f32.gmra.mxu0 %v1138
        %v1177 = vpop.f32.mrf.mxu0
        %v1178 = vadd.f32 0.0, %v1177
        %1179 = vdwg.mxu0
        %1180 = vmatpush.msra.mxu0 0.0
        %1181 = vmatpush.msra.mxu0 0.0
        %1182 = vmatpush.msra.mxu0 0.0
        %1183 = vmatpush.msra.mxu0 0.0
        %1184 = vmatpush.msra.mxu0 0.0
        %1185 = vmatpush.msra.mxu0 0.0
        %1186 = vmatpush.msra.mxu0 0.0
        %1187 = vmatpush.msra.mxu0 0.0
        %1188 = vmatpush.msra.mxu0 0.0
        %1189 = vmatpush.msra.mxu0 0.0
        %1190 = vmatpush.msra.mxu0 0.0
        %1191 = vmatpush.msra.mxu0 0.0
        %1192 = vmatpush.msra.mxu0 0.0
        %1193 = vmatpush.msra.mxu0 0.0
        %1194 = vmatpush.msra.mxu0 0.0
        %1195 = vmatpush.msra.mxu0 %v1133
        %1196 = vmatmul.f32.gmra.mxu0 %v1138
        %v1197 = vpop.f32.mrf.mxu0
        %v1198 = vadd.f32 0.0, %v1197
        %1199 = vdwg.mxu0
        %1200 = vmatpush.msra.mxu0 0.0
        %1201 = vmatpush.msra.mxu0 0.0
        %1202 = vmatpush.msra.mxu0 0.0
        %1203 = vmatpush.msra.mxu0 0.0
        %1204 = vmatpush.msra.mxu0 0.0
        %1205 = vmatpush.msra.mxu0 0.0
        %1206 = vmatpush.msra.mxu0 0.0
        %1207 = vmatpush.msra.mxu0 0.0
        %1208 = vmatpush.msra.mxu0 0.0
        %1209 = vmatpush.msra.mxu0 0.0
        %1210 = vmatpush.msra.mxu0 0.0
        %1211 = vmatpush.msra.mxu0 0.0
        %1212 = vmatpush.msra.mxu0 0.0
        %1213 = vmatpush.msra.mxu0 0.0
        %1214 = vmatpush.msra.mxu0 0.0
        %1215 = vmatpush.msra.mxu0 %v1134
        %1216 = vmatmul.f32.gmra.mxu0 %v1138
        %v1217 = vpop.f32.mrf.mxu0
        %v1218 = vadd.f32 0.0, %v1217
        %1219 = vdwg.mxu0
        %v1220 = vadd.f32 %v1102, %v1158
        %v1221 = vadd.f32 %v1103, %v1178
        %v1222 = vadd.f32 %v1104, %v1198
        %v1223 = vadd.f32 %v1105, %v1218
        %vm1224 = vcmp.ge.f32.partialorder %v1220, 0.0
        %vm1225 = vcmp.ge.f32.partialorder %v1221, 0.0
        %vm1226 = vcmp.ge.f32.partialorder %v1222, 0.0
        %vm1227 = vcmp.ge.f32.partialorder %v1223, 0.0
        %1228 = vrot.lane.b32.xlu0 %v334, 121
        %v1229 = vpop.permute.xlu0 %1228
        %s1230 = vtos %v1229
        %v1231 = vstv %s1230
        %v1233 = vmul.f32 %v1231, %v1220
        %v1234 = vmul.f32 %v1231, %v1221
        %v1235 = vmul.f32 %v1231, %v1222
        %v1236 = vmul.f32 %v1231, %v1223
        %v1237 = vsel %vm1224, %v1220, %v1233
        %v1238 = vsel %vm1225, %v1221, %v1234
        %v1239 = vsel %vm1226, %v1222, %v1235
        %v1240 = vsel %vm1227, %v1223, %v1236
        %v1241 = vsel %vm613, %v1237, 0.0
        %v1242 = vsel %vm614, %v1238, 0.0
        %v1243 = vsel %vm615, %v1239, 0.0
        %v1244 = vsel %vm616, %v1240, 0.0
        %v1245 = vrot.slane %v1241, 4
        %v1246 = vadd.f32 %v1241, %v1245
        %v1247 = vrot.slane %v1246, 2
        %v1248 = vadd.f32 %v1246, %v1247
        %v1249 = vrot.slane %v1248, 1
        %v1250 = vadd.f32 %v1248, %v1249
        %v1251 = vrot.slane %v1242, 4
        %v1252 = vadd.f32 %v1242, %v1251
        %v1253 = vrot.slane %v1252, 2
        %v1254 = vadd.f32 %v1252, %v1253
        %v1255 = vrot.slane %v1254, 1
        %v1256 = vadd.f32 %v1254, %v1255
        %v1257 = vrot.slane %v1243, 4
        %v1258 = vadd.f32 %v1243, %v1257
        %v1259 = vrot.slane %v1258, 2
        %v1260 = vadd.f32 %v1258, %v1259
        %v1261 = vrot.slane %v1260, 1
        %v1262 = vadd.f32 %v1260, %v1261
        %v1263 = vrot.slane %v1244, 4
        %v1264 = vadd.f32 %v1244, %v1263
        %v1265 = vrot.slane %v1264, 2
        %v1266 = vadd.f32 %v1264, %v1265
        %v1267 = vrot.slane %v1266, 1
        %v1268 = vadd.f32 %v1266, %v1267
        %v1269 = vmul.f32 %v1241, %v1241
        %v1270 = vmul.f32 %v1242, %v1242
        %v1271 = vmul.f32 %v1243, %v1243
        %v1272 = vmul.f32 %v1244, %v1244
        %v1273 = vrot.slane %v1269, 4
        %v1274 = vadd.f32 %v1269, %v1273
        %v1275 = vrot.slane %v1274, 2
        %v1276 = vadd.f32 %v1274, %v1275
        %v1277 = vrot.slane %v1276, 1
        %v1278 = vadd.f32 %v1276, %v1277
        %v1279 = vrot.slane %v1270, 4
        %v1280 = vadd.f32 %v1270, %v1279
        %v1281 = vrot.slane %v1280, 2
        %v1282 = vadd.f32 %v1280, %v1281
        %v1283 = vrot.slane %v1282, 1
        %v1284 = vadd.f32 %v1282, %v1283
        %v1285 = vrot.slane %v1271, 4
        %v1286 = vadd.f32 %v1271, %v1285
        %v1287 = vrot.slane %v1286, 2
        %v1288 = vadd.f32 %v1286, %v1287
        %v1289 = vrot.slane %v1288, 1
        %v1290 = vadd.f32 %v1288, %v1289
        %v1291 = vrot.slane %v1272, 4
        %v1292 = vadd.f32 %v1272, %v1291
        %v1293 = vrot.slane %v1292, 2
        %v1294 = vadd.f32 %v1292, %v1293
        %v1295 = vrot.slane %v1294, 1
        %v1296 = vadd.f32 %v1294, %v1295
        %v1297 = vsel %vm673, %v1250, %v1278
        %v1298 = vsel %vm673, %v1256, %v1284
        %v1299 = vsel %vm673, %v1262, %v1290
        %v1300 = vsel %vm673, %v1268, %v1296
        %1301 = vmatpush.xpose.msra.mxu0 0.0
        %1302 = vmatpush.xpose.msra.mxu0 0.0
        %1303 = vmatpush.xpose.msra.mxu0 0.0
        %1304 = vmatpush.xpose.msra.mxu0 0.0
        %1305 = vmatpush.xpose.msra.mxu0 0.0
        %1306 = vmatpush.xpose.msra.mxu0 0.0
        %1307 = vmatpush.xpose.msra.mxu0 0.0
        %1308 = vmatpush.xpose.msra.mxu0 0.0
        %1309 = vmatpush.xpose.msra.mxu0 0.0
        %1310 = vmatpush.xpose.msra.mxu0 0.0
        %1311 = vmatpush.xpose.msra.mxu0 0.0
        %1312 = vmatpush.xpose.msra.mxu0 0.0
        %1313 = vmatpush.xpose.msra.mxu0 0.0
        %1314 = vmatpush.xpose.msra.mxu0 0.0
        %1315 = vmatpush.xpose.msra.mxu0 0.0
        %1316 = vmatpush.xpose.msra.mxu0 %v369
        %1317 = vmatmul.f32.gmra.mxu0 %v1297
        %v1318 = vpop.f32.mrf.mxu0
        %v1319 = vadd.f32 0.0, %v1318
        %1320 = vdwg.mxu0
        %1321 = vmatpush.xpose.msra.mxu0 0.0
        %1322 = vmatpush.xpose.msra.mxu0 0.0
        %1323 = vmatpush.xpose.msra.mxu0 0.0
        %1324 = vmatpush.xpose.msra.mxu0 0.0
        %1325 = vmatpush.xpose.msra.mxu0 0.0
        %1326 = vmatpush.xpose.msra.mxu0 0.0
        %1327 = vmatpush.xpose.msra.mxu0 0.0
        %1328 = vmatpush.xpose.msra.mxu0 0.0
        %1329 = vmatpush.xpose.msra.mxu0 0.0
        %1330 = vmatpush.xpose.msra.mxu0 0.0
        %1331 = vmatpush.xpose.msra.mxu0 0.0
        %1332 = vmatpush.xpose.msra.mxu0 0.0
        %1333 = vmatpush.xpose.msra.mxu0 0.0
        %1334 = vmatpush.xpose.msra.mxu0 0.0
        %1335 = vmatpush.xpose.msra.mxu0 0.0
        %1336 = vmatpush.xpose.msra.mxu0 %v370
        %1337 = vmatmul.f32.gmra.mxu0 %v1298
        %v1338 = vpop.f32.mrf.mxu0
        %v1339 = vadd.f32 %v1319, %v1338
        %1340 = vdwg.mxu0
        %1341 = vmatpush.xpose.msra.mxu0 0.0
        %1342 = vmatpush.xpose.msra.mxu0 0.0
        %1343 = vmatpush.xpose.msra.mxu0 0.0
        %1344 = vmatpush.xpose.msra.mxu0 0.0
        %1345 = vmatpush.xpose.msra.mxu0 0.0
        %1346 = vmatpush.xpose.msra.mxu0 0.0
        %1347 = vmatpush.xpose.msra.mxu0 0.0
        %1348 = vmatpush.xpose.msra.mxu0 0.0
        %1349 = vmatpush.xpose.msra.mxu0 0.0
        %1350 = vmatpush.xpose.msra.mxu0 0.0
        %1351 = vmatpush.xpose.msra.mxu0 0.0
        %1352 = vmatpush.xpose.msra.mxu0 0.0
        %1353 = vmatpush.xpose.msra.mxu0 0.0
        %1354 = vmatpush.xpose.msra.mxu0 0.0
        %1355 = vmatpush.xpose.msra.mxu0 0.0
        %1356 = vmatpush.xpose.msra.mxu0 %v371
        %1357 = vmatmul.f32.gmra.mxu0 %v1299
        %v1358 = vpop.f32.mrf.mxu0
        %v1359 = vadd.f32 %v1339, %v1358
        %1360 = vdwg.mxu0
        %1361 = vmatpush.xpose.msra.mxu0 0.0
        %1362 = vmatpush.xpose.msra.mxu0 0.0
        %1363 = vmatpush.xpose.msra.mxu0 0.0
        %1364 = vmatpush.xpose.msra.mxu0 0.0
        %1365 = vmatpush.xpose.msra.mxu0 0.0
        %1366 = vmatpush.xpose.msra.mxu0 0.0
        %1367 = vmatpush.xpose.msra.mxu0 0.0
        %1368 = vmatpush.xpose.msra.mxu0 0.0
        %1369 = vmatpush.xpose.msra.mxu0 0.0
        %1370 = vmatpush.xpose.msra.mxu0 0.0
        %1371 = vmatpush.xpose.msra.mxu0 0.0
        %1372 = vmatpush.xpose.msra.mxu0 0.0
        %1373 = vmatpush.xpose.msra.mxu0 0.0
        %1374 = vmatpush.xpose.msra.mxu0 0.0
        %1375 = vmatpush.xpose.msra.mxu0 0.0
        %1376 = vmatpush.xpose.msra.mxu0 %v372
        %1377 = vmatmul.f32.gmra.mxu0 %v1300
        %v1378 = vpop.f32.mrf.mxu0
        %v1379 = vadd.f32 %v1359, %v1378
        %1380 = vdwg.mxu0
        %v1381 = vmul.f32 %v1379, 0.0009765625
        %v1382 = vmul.f32 %v1381, %v1381
        %v1384 = vrot.slane %v1382, 7
        %v1386 = vsub.f32 %v1381, %v1384
        %v1387 = vmax.f32 %v1386, 0.0
        %v1388 = vadd.f32 %v1387, 1e-06
        %v1389 = vrsqrt.pop %v1388
        %v1390 = vmul.f32 %v1389, %v1388
        %v1391 = vmul.f32 %v1390, %v1389
        %v1392 = vmul.f32 0.5, %v1391
        %v1393 = vsub.f32 1.5, %v1392
        %v1394 = vmul.f32 %v1389, %v1393
        %vm1395 = vweird.f32 %v1388
        %vm1396 = vweird.f32 %v1389
        %vm1397 = vmor %vm1395, %vm1396
        %v1398 = vsel %vm1397, %v1389, %v1394
        %v1400 = vrot.slane %v1398, 1
        %v1402 = vmul.f32 %v1381, %v1400
        %v1404 = vrot.slane %v1402, 7
        %v1406 = vsel %vm673, %v1400, %v1404
        %v1408 = vsel %vm411, %v1406, 0
        %1410 = vmatpush.msra.mxu0 0.0
        %1411 = vmatpush.msra.mxu0 0.0
        %1412 = vmatpush.msra.mxu0 0.0
        %1413 = vmatpush.msra.mxu0 0.0
        %1414 = vmatpush.msra.mxu0 0.0
        %1415 = vmatpush.msra.mxu0 0.0
        %1416 = vmatpush.msra.mxu0 0.0
        %1417 = vmatpush.msra.mxu0 0.0
        %1418 = vmatpush.msra.mxu0 0.0
        %1419 = vmatpush.msra.mxu0 0.0
        %1420 = vmatpush.msra.mxu0 0.0
        %1421 = vmatpush.msra.mxu0 0.0
        %1422 = vmatpush.msra.mxu0 0.0
        %1423 = vmatpush.msra.mxu0 0.0
        %1424 = vmatpush.msra.mxu0 0.0
        %1425 = vmatpush.msra.mxu0 %v416
        %1426 = vmatmul.f32.gmra.mxu0 %v1408
        %v1427 = vpop.f32.mrf.mxu0
        %v1428 = vadd.f32 0.0, %v1427
        %1429 = vdwg.mxu0
        %1430 = vmatpush.msra.mxu0 0.0
        %1431 = vmatpush.msra.mxu0 0.0
        %1432 = vmatpush.msra.mxu0 0.0
        %1433 = vmatpush.msra.mxu0 0.0
        %1434 = vmatpush.msra.mxu0 0.0
        %1435 = vmatpush.msra.mxu0 0.0
        %1436 = vmatpush.msra.mxu0 0.0
        %1437 = vmatpush.msra.mxu0 0.0
        %1438 = vmatpush.msra.mxu0 0.0
        %1439 = vmatpush.msra.mxu0 0.0
        %1440 = vmatpush.msra.mxu0 0.0
        %1441 = vmatpush.msra.mxu0 0.0
        %1442 = vmatpush.msra.mxu0 0.0
        %1443 = vmatpush.msra.mxu0 0.0
        %1444 = vmatpush.msra.mxu0 0.0
        %1445 = vmatpush.msra.mxu0 %v419
        %1446 = vmatmul.f32.gmra.mxu0 %v1408
        %v1447 = vpop.f32.mrf.mxu0
        %v1448 = vadd.f32 0.0, %v1447
        %1449 = vdwg.mxu0
        %1450 = vmatpush.msra.mxu0 0.0
        %1451 = vmatpush.msra.mxu0 0.0
        %1452 = vmatpush.msra.mxu0 0.0
        %1453 = vmatpush.msra.mxu0 0.0
        %1454 = vmatpush.msra.mxu0 0.0
        %1455 = vmatpush.msra.mxu0 0.0
        %1456 = vmatpush.msra.mxu0 0.0
        %1457 = vmatpush.msra.mxu0 0.0
        %1458 = vmatpush.msra.mxu0 0.0
        %1459 = vmatpush.msra.mxu0 0.0
        %1460 = vmatpush.msra.mxu0 0.0
        %1461 = vmatpush.msra.mxu0 0.0
        %1462 = vmatpush.msra.mxu0 0.0
        %1463 = vmatpush.msra.mxu0 0.0
        %1464 = vmatpush.msra.mxu0 0.0
        %1465 = vmatpush.msra.mxu0 %v422
        %1466 = vmatmul.f32.gmra.mxu0 %v1408
        %v1467 = vpop.f32.mrf.mxu0
        %v1468 = vadd.f32 0.0, %v1467
        %1469 = vdwg.mxu0
        %1470 = vmatpush.msra.mxu0 0.0
        %1471 = vmatpush.msra.mxu0 0.0
        %1472 = vmatpush.msra.mxu0 0.0
        %1473 = vmatpush.msra.mxu0 0.0
        %1474 = vmatpush.msra.mxu0 0.0
        %1475 = vmatpush.msra.mxu0 0.0
        %1476 = vmatpush.msra.mxu0 0.0
        %1477 = vmatpush.msra.mxu0 0.0
        %1478 = vmatpush.msra.mxu0 0.0
        %1479 = vmatpush.msra.mxu0 0.0
        %1480 = vmatpush.msra.mxu0 0.0
        %1481 = vmatpush.msra.mxu0 0.0
        %1482 = vmatpush.msra.mxu0 0.0
        %1483 = vmatpush.msra.mxu0 0.0
        %1484 = vmatpush.msra.mxu0 0.0
        %1485 = vmatpush.msra.mxu0 %v425
        %1486 = vmatmul.f32.gmra.mxu0 %v1408
        %v1487 = vpop.f32.mrf.mxu0
        %v1488 = vadd.f32 0.0, %v1487
        %1489 = vdwg.mxu0
        %v1490 = vperm.slane %v1428, 0
        %v1491 = vperm.slane %v1448, 0
        %v1492 = vperm.slane %v1468, 0
        %v1493 = vperm.slane %v1488, 0
        %v1494 = vmul.f32 %v1241, %v1490
        %v1495 = vmul.f32 %v1242, %v1491
        %v1496 = vmul.f32 %v1243, %v1492
        %v1497 = vmul.f32 %v1244, %v1493
        %v1498 = vperm.slane %v1428, 1
        %v1499 = vperm.slane %v1448, 1
        %v1500 = vperm.slane %v1468, 1
        %v1501 = vperm.slane %v1488, 1
        %v1502 = vsub.f32 %v1494, %v1498
        %v1503 = vsub.f32 %v1495, %v1499
        %v1504 = vsub.f32 %v1496, %v1500
        %v1505 = vsub.f32 %v1497, %v1501
        %1506 = vset.pattern.permute.xlu0 3
        %1507 = vperm.xlu0 %1506, %v333
        %v1508 = vpop.permute.xlu0 %1507
        %v1510 = vmul.f32 %v1508, %v1502
        %v1511 = vmul.f32 %v1508, %v1503
        %v1512 = vmul.f32 %v1508, %v1504
        %v1513 = vmul.f32 %v1508, %v1505
        %1514 = vset.pattern.permute.xlu0 4
        %1515 = vperm.xlu0 %1514, %v333
        %v1516 = vpop.permute.xlu0 %1515
        %v1518 = vadd.f32 %v1510, %v1516
        %v1519 = vadd.f32 %v1511, %v1516
        %v1520 = vadd.f32 %v1512, %v1516
        %v1521 = vadd.f32 %v1513, %v1516
        %1522 = vset.pattern.permute.xlu0 5
        %1523 = vperm.xlu0 %1522, %v333
        %v1524 = vpop.permute.xlu0 %1523
        %v1527 = vsel %vm507, %v336, 0
        %1529 = vmatpush.msra.mxu0 0.0
        %1530 = vmatpush.msra.mxu0 0.0
        %1531 = vmatpush.msra.mxu0 0.0
        %1532 = vmatpush.msra.mxu0 0.0
        %1533 = vmatpush.msra.mxu0 0.0
        %1534 = vmatpush.msra.mxu0 0.0
        %1535 = vmatpush.msra.mxu0 0.0
        %1536 = vmatpush.msra.mxu0 0.0
        %1537 = vmatpush.msra.mxu0 0.0
        %1538 = vmatpush.msra.mxu0 0.0
        %1539 = vmatpush.msra.mxu0 0.0
        %1540 = vmatpush.msra.mxu0 0.0
        %1541 = vmatpush.msra.mxu0 0.0
        %1542 = vmatpush.msra.mxu0 0.0
        %1543 = vmatpush.msra.mxu0 0.0
        %1544 = vmatpush.msra.mxu0 %v1518
        %1545 = vmatmul.f32.gmra.mxu0 %v1527
        %v1546 = vpop.f32.mrf.mxu0
        %v1547 = vadd.f32 %v1524, %v1546
        %1548 = vdwg.mxu0
        %1549 = vmatpush.msra.mxu0 0.0
        %1550 = vmatpush.msra.mxu0 0.0
        %1551 = vmatpush.msra.mxu0 0.0
        %1552 = vmatpush.msra.mxu0 0.0
        %1553 = vmatpush.msra.mxu0 0.0
        %1554 = vmatpush.msra.mxu0 0.0
        %1555 = vmatpush.msra.mxu0 0.0
        %1556 = vmatpush.msra.mxu0 0.0
        %1557 = vmatpush.msra.mxu0 0.0
        %1558 = vmatpush.msra.mxu0 0.0
        %1559 = vmatpush.msra.mxu0 0.0
        %1560 = vmatpush.msra.mxu0 0.0
        %1561 = vmatpush.msra.mxu0 0.0
        %1562 = vmatpush.msra.mxu0 0.0
        %1563 = vmatpush.msra.mxu0 0.0
        %1564 = vmatpush.msra.mxu0 %v1519
        %1565 = vmatmul.f32.gmra.mxu0 %v1527
        %v1566 = vpop.f32.mrf.mxu0
        %v1567 = vadd.f32 %v1524, %v1566
        %1568 = vdwg.mxu0
        %1569 = vmatpush.msra.mxu0 0.0
        %1570 = vmatpush.msra.mxu0 0.0
        %1571 = vmatpush.msra.mxu0 0.0
        %1572 = vmatpush.msra.mxu0 0.0
        %1573 = vmatpush.msra.mxu0 0.0
        %1574 = vmatpush.msra.mxu0 0.0
        %1575 = vmatpush.msra.mxu0 0.0
        %1576 = vmatpush.msra.mxu0 0.0
        %1577 = vmatpush.msra.mxu0 0.0
        %1578 = vmatpush.msra.mxu0 0.0
        %1579 = vmatpush.msra.mxu0 0.0
        %1580 = vmatpush.msra.mxu0 0.0
        %1581 = vmatpush.msra.mxu0 0.0
        %1582 = vmatpush.msra.mxu0 0.0
        %1583 = vmatpush.msra.mxu0 0.0
        %1584 = vmatpush.msra.mxu0 %v1520
        %1585 = vmatmul.f32.gmra.mxu0 %v1527
        %v1586 = vpop.f32.mrf.mxu0
        %v1587 = vadd.f32 %v1524, %v1586
        %1588 = vdwg.mxu0
        %1589 = vmatpush.msra.mxu0 0.0
        %1590 = vmatpush.msra.mxu0 0.0
        %1591 = vmatpush.msra.mxu0 0.0
        %1592 = vmatpush.msra.mxu0 0.0
        %1593 = vmatpush.msra.mxu0 0.0
        %1594 = vmatpush.msra.mxu0 0.0
        %1595 = vmatpush.msra.mxu0 0.0
        %1596 = vmatpush.msra.mxu0 0.0
        %1597 = vmatpush.msra.mxu0 0.0
        %1598 = vmatpush.msra.mxu0 0.0
        %1599 = vmatpush.msra.mxu0 0.0
        %1600 = vmatpush.msra.mxu0 0.0
        %1601 = vmatpush.msra.mxu0 0.0
        %1602 = vmatpush.msra.mxu0 0.0
        %1603 = vmatpush.msra.mxu0 0.0
        %1604 = vmatpush.msra.mxu0 %v1521
        %1605 = vmatmul.f32.gmra.mxu0 %v1527
        %v1606 = vpop.f32.mrf.mxu0
        %v1607 = vadd.f32 %v1524, %v1606
        %1608 = vdwg.mxu0
        %v1609 = vadd.f32 %v1547, %v337
        %v1610 = vadd.f32 %v1567, %v338
        %v1611 = vadd.f32 %v1587, %v339
        %v1612 = vadd.f32 %v1607, %v340
        %1613 = vst [vmem:[%s326] sm:$0xff] %v1609
        %1614 = vst [vmem:[%s326 + $0x8] sm:$0xff] %v1610
        %1615 = vst [vmem:[%s326 + $0x10] sm:$0xff] %v1611
        %1616 = vst [vmem:[%s326 + $0x18] sm:$0xff] %v1612
        %s1617 = sand.u32 %s169, 1
        %s1618 = scalar_lea.sflag [#allocation4], %s1617
        %s1619 = sand.u32 %s169, 1
        %s1620 = smul.addr %s1619, 32
        %s1621 = scalar_lea.vmem [#allocation10], %s1620
        // Predicated region
        $region61: #{tpu_custom_call.1} parent=43 // pred_check
          %p1622 = pneg %p179
        $region62: #{tpu_custom_call.1} parent=43 // pred_check_branch
          %1624 = sbr.rel (%p1622) target = $region64
        $region63: #{tpu_custom_call.1} parent=43 // pred_region
          %s1625 = smul.u32 4, %s25
          %1627 = vsyncadd %s1618, 0
          %s1628 = smul.addr %s1625, 8
          %s1629 = scalar_lea.hbm %s6, %s1628
          %s1631 = sshll.u32 %s1621, 4
          %s1632 = int_to_ptr.vmem [resolvable:$true] %s1631
          %s1633 = sshll.u32 %s1629, 4
          %s1634 = int_to_ptr.hbm [resolvable:$true] %s1633
          %1636 = dma.vmem_to_hbm [thread:$0]  %s1632, 512, %s1634, %s1618
        $region64: #{tpu_custom_call.1} parent=43 // pred_fallthru
          _
      $region44: #{tpu_custom_call.1} parent=5 // pred_fallthru
        _
      %p1637 = scmp.le.s32.totalorder 2, %s20
      // Predicated region
      $region65: #{tpu_custom_call.1} parent=5 // pred_check
        %p1638 = pneg %p1637
      $region66: #{tpu_custom_call.1} parent=5 // pred_check_branch
        %1640 = sbr.rel (%p1638) target = $region68
      $region67: #{tpu_custom_call.1} parent=5 // pred_region
        %s1641 = ssub.s32 %s20, 2
        // Predicated region
        $region69: #{tpu_custom_call.1} parent=67 // pred_check
          %p1642 = pneg %p185
        $region70: #{tpu_custom_call.1} parent=67 // pred_check_branch
          %1644 = sbr.rel (%p1642) target = $region72
        $region71: #{tpu_custom_call.1} parent=67 // pred_region
          %s1645 = sand.u32 %s170, 1
          %s1646 = scalar_lea.sflag [#allocation4], %s1645
          %s1647 = sand.u32 %s170, 1
          %s1648 = smul.addr %s1647, 32
          %s1649 = scalar_lea.vmem [#allocation10], %s1648
          %1651 = dma.done %s1646, 512
        $region72: #{tpu_custom_call.1} parent=67 // pred_fallthru
          _
      $region68: #{tpu_custom_call.1} parent=5 // pred_fallthru
        _
    $region6: #{tpu_custom_call.1} parent=1 // loop_footer
      %s24 = sadd.s32 1, %s20
    $region7: #{tpu_custom_call.1} parent=1 // loop_footer_branch
      %19 = sbr.rel target = $region3
    $region8: #{tpu_custom_call.1} parent=1 // loop_exit
      _
    %1652 = vsyncpa [#allocation3], 1
    %s1653 = scalar_lea.sflag [#allocation3], 1
    %1654 = vsyncpa %s1653, 1
    %1655 = vsyncpa [#allocation6], 1
    %1656 = vsyncpa [#allocation9], 1
    %1657 = vsyncpa [#allocation4], 1
    %s1658 = scalar_lea.sflag [#allocation4], 1
    %1659 = vsyncpa %s1658, 1

</llo_original>
